<compile_context>
chip_gen: v7x
topology: tpu7x:2x2x1
jax: 0.10.0
libtpu: 0.0.40
codegen_flags: <defaults>
</compile_context>

<pallas_src>
import jax
import jax.numpy as jnp
from jax import lax
from jax.experimental import pallas as pl
from jax.experimental.pallas import tpu as pltpu

HIDDEN = 32      # RNN1_OUT_SIZE
FC2 = 8          # FC2_OUT_SIZE
NCLASS = 3       # OUTPUT_SIZE (num_of_classes)
LANE = 128       # batch lanes per stream
OUT_ROWS = 8     # folded-output rows padded to one sublane tile


def _round_up(n, m):
    return (n + m - 1) // m * m


def taste_kernel(x_ref, len_ref, wih_ref, whh_ref, b_ref, wo_ref, bo_ref, out_ref):
    """Transposed layout: batch on lanes, features on sublanes.

    x_ref   : (T, btile)      f32   inputs, batch on lanes
    len_ref : (1, btile)      i32   per-lane sequence lengths
    wih_ref : (4H, 1)         f32   W_ih column (i/f/o rows pre-scaled by 0.5)
    whh_ref : (4H, H)         f32   W_hh^T      (i/f/o rows pre-scaled by 0.5)
    b_ref   : (4H, 1)         f32   b_ih+b_hh   (i/f/o rows pre-scaled by 0.5)
    wo_ref  : (OUT_ROWS, H)   f32   folded (OUT ∘ FC_2) weight, transposed
    bo_ref  : (OUT_ROWS, 1)   f32   folded bias
    out_ref : (OUT_ROWS, btile)
    """
    H = HIDDEN
    T, btile = x_ref.shape
    n_streams = btile // LANE

    # Weights are loaded once per grid step (constant block index -> Pallas
    # does not re-DMA them across grid iterations).
    wih = wih_ref[...]          # (4H, 1)
    whh = whh_ref[...]          # (4H, H)
    bias = b_ref[...]           # (4H, 1)
    wo = wo_ref[...]            # (OUT_ROWS, H)
    bo = bo_ref[...]            # (OUT_ROWS, 1)

    # Independent batch streams in the SAME basic block -> scheduler interleaves
    # their MXU pushes / EUP pushes to hide the recurrence latency.
    for s in range(n_streams):
        lo = s * LANE
        x_s = x_ref[:, lo:lo + LANE]        # (T, 128)   1 vreg
        lens = len_ref[:, lo:lo + LANE]     # (1, 128)   int32 lane mask source

        h = jnp.zeros((H, LANE), jnp.float32)
        c = jnp.zeros((H, LANE), jnp.float32)

        # Static T -> full unroll; h/c stay in vregs across steps.
        for t in range(T):
            x_t = x_s[t:t + 1, :]                                   # (1, 128)
            # x-term + bias: off the recurrence dependency chain.
            gates = (wih * x_t + bias
                     + jnp.dot(whh, h, preferred_element_type=jnp.float32))
            # Single transcendental pass over the full (4H, 128) block.
            tg = jnp.tanh(gates)
            i = 0.5 * tg[0:H, :] + 0.5          # sigmoid(i)  (PyTorch order i,f,g,o)
            f = 0.5 * tg[H:2 * H, :] + 0.5      # sigmoid(f)
            g = tg[2 * H:3 * H, :]              # tanh(g)
            o = 0.5 * tg[3 * H:4 * H, :] + 0.5  # sigmoid(o)
            c_new = f * c + i * g
            h_new = o * jnp.tanh(c_new)
            # pack_padded_sequence semantics: freeze h/c once t >= length[b]
            m = t < lens                         # (1, 128) lane mask
            h = jnp.where(m, h_new, h)
            c = jnp.where(m, c_new, c)

        # Folded (OUT_LAYER ∘ FC_2) affine; lane-dense (OUT_ROWS, 128) store.
        out_ref[:, lo:lo + LANE] = (
            jnp.dot(wo, h, preferred_element_type=jnp.float32) + bo)


def taste_network_pallas(x, lengths, params):
    """x: (B, T) float32 (input_size=1 squeezed), lengths: (B,) int32."""
    wih, whh, bias, w2, b2, w3, b3 = params
    B, T = x.shape
    H = HIDDEN

    # --- host-side weight prep -------------------------------------------
    # single-tanh trick: sigmoid(z) = 0.5*tanh(z/2) + 0.5, so pre-scale the
    # i/f/o gate pre-activations by 0.5 (g stays unscaled).
    scale = jnp.ones((4 * H,), jnp.float32)
    scale = scale.at[0:2 * H].set(0.5).at[3 * H:4 * H].set(0.5)

    wih_col = (wih[0] * scale)[:, None]                 # (4H, 1)
    whh_t = (whh * scale[None, :]).T                    # (4H, H)
    bias_col = (bias[0] * scale)[:, None]               # (4H, 1)

    # Fold FC_2 and OUT_LAYER (affine, no nonlinearity between) into a single
    # (H, NCLASS) linear; transpose and pad rows to one sublane tile.
    w_fold = w2 @ w3                                    # (H, NCLASS)
    b_fold = b2 @ w3 + b3                               # (1, NCLASS)
    wo_t = jnp.zeros((OUT_ROWS, H), jnp.float32).at[:NCLASS].set(w_fold.T)
    bo_col = jnp.zeros((OUT_ROWS, 1), jnp.float32).at[:NCLASS, 0].set(b_fold[0])

    # --- batch tiling: batch on lanes -------------------------------------
    b_pad = _round_up(max(B, 1), LANE)
    n128 = b_pad // LANE
    # 2 streams per grid step when batch is big (latency hiding), and keep
    # n_bt >= 2 when possible so v7x's second TensorCore is not idle.
    btile = 2 * LANE if (n128 >= 4 and n128 % 2 == 0) else LANE
    n_bt = b_pad // btile

    xT = jnp.zeros((T, b_pad), jnp.float32).at[:, :B].set(x.T)
    lT = jnp.zeros((1, b_pad), jnp.int32).at[0, :B].set(lengths.astype(jnp.int32))

    out = pl.pallas_call(
        taste_kernel,
        out_shape=jax.ShapeDtypeStruct((OUT_ROWS, b_pad), jnp.float32),
        grid_spec=pltpu.PrefetchScalarGridSpec(
            num_scalar_prefetch=0,
            grid=(n_bt,),
            in_specs=[
                pl.BlockSpec((T, btile), lambda i: (0, i)),           # x^T
                pl.BlockSpec((1, btile), lambda i: (0, i)),           # lengths
                pl.BlockSpec((4 * H, 1), lambda i: (0, 0)),           # W_ih col
                pl.BlockSpec((4 * H, H), lambda i: (0, 0)),           # W_hh^T
                pl.BlockSpec((4 * H, 1), lambda i: (0, 0)),           # bias col
                pl.BlockSpec((OUT_ROWS, H), lambda i: (0, 0)),        # folded W^T
                pl.BlockSpec((OUT_ROWS, 1), lambda i: (0, 0)),        # folded b
            ],
            out_specs=pl.BlockSpec((OUT_ROWS, btile), lambda i: (0, i)),
        ),
        compiler_params=pltpu.CompilerParams(dimension_semantics=("parallel",)),
    )(xT, lT, wih_col, whh_t, bias_col, wo_t, bo_col)
    return out[:NCLASS, :B].T


def reference_jax(x, lengths, params):
    """Pure-JAX reference mirroring PyTorch pack_padded + LSTM + FC_2 + OUT."""
    wih, whh, bias, w2, b2, w3, b3 = params
    B, T = x.shape
    H = HIDDEN

    def step(carry, t):
        h, c = carry
        x_t = x[:, t][:, None]
        gates = x_t * wih + h @ whh + bias
        i = jax.nn.sigmoid(gates[:, :H])
        f = jax.nn.sigmoid(gates[:, H:2 * H])
        g = jnp.tanh(gates[:, 2 * H:3 * H])
        o = jax.nn.sigmoid(gates[:, 3 * H:])
        c_new = f * c + i * g
        h_new = o * jnp.tanh(c_new)
        m = (t < lengths)[:, None]
        return (jnp.where(m, h_new, h), jnp.where(m, c_new, c)), None

    init = (jnp.zeros((B, H), jnp.float32), jnp.zeros((B, H), jnp.float32))
    (h, _), _ = lax.scan(step, init, jnp.arange(T))
    z = h @ w2 + b2
    return z @ w3 + b3


def init_params(key):
    ks = jax.random.split(key, 7)
    s_lstm = 1.0 / jnp.sqrt(HIDDEN)
    wih = jax.random.uniform(ks[0], (1, 4 * HIDDEN), jnp.float32, -s_lstm, s_lstm)
    whh = jax.random.uniform(ks[1], (HIDDEN, 4 * HIDDEN), jnp.float32, -s_lstm, s_lstm)
    bias = jax.random.uniform(ks[2], (1, 4 * HIDDEN), jnp.float32, -s_lstm, s_lstm)  # b_ih+b_hh
    s2 = 1.0 / jnp.sqrt(HIDDEN)
    w2 = jax.random.uniform(ks[3], (HIDDEN, FC2), jnp.float32, -s2, s2)
    b2 = jax.random.uniform(ks[4], (1, FC2), jnp.float32, -s2, s2)
    s3 = 1.0 / jnp.sqrt(FC2)
    w3 = jax.random.uniform(ks[5], (FC2, NCLASS), jnp.float32, -s3, s3)
    b3 = jax.random.uniform(ks[6], (1, NCLASS), jnp.float32, -s3, s3)
    return (wih, whh, bias, w2, b2, w3, b3)


if __name__ == "__main__":
    key = jax.random.PRNGKey(0)
    kp, kx = jax.random.split(key)
    params = init_params(kp)

    B, T = 2, 8
    lengths = jnp.array([8, 5], dtype=jnp.int32)  # sorted desc, as pack_padded requires
    x = jax.random.normal(kx, (B, T), jnp.float32)
    # zero the padded tail (matches pad_sequence padding); masked anyway
    x = jnp.where(jnp.arange(T)[None, :] < lengths[:, None], x, 0.0)

    out = taste_network_pallas(x, lengths, params)
    out = jax.block_until_ready(out)

    ref = reference_jax(x, lengths, params)
    assert out.shape == (B, NCLASS)
    assert jnp.allclose(out, ref, atol=1e-4, rtol=1e-4), (out, ref)
    print("KERNEL_OK")
</pallas_src>

<mosaic_0001>
module attributes {stable_mosaic.version = 11 : i64} {
  func.func @taste_kernel(%arg0: i32, %arg1: memref<8x128xf32, #tpu.memory_space<vmem>>, %arg2: memref<1x128xi32, #tpu.memory_space<vmem>>, %arg3: memref<128x1xf32, #tpu.memory_space<vmem>>, %arg4: memref<128x32xf32, #tpu.memory_space<vmem>>, %arg5: memref<128x1xf32, #tpu.memory_space<vmem>>, %arg6: memref<8x32xf32, #tpu.memory_space<vmem>>, %arg7: memref<8x1xf32, #tpu.memory_space<vmem>>, %arg8: memref<8x128xf32, #tpu.memory_space<vmem>>) attributes {dimension_semantics = [#tpu.dimension_semantics<parallel>], iteration_bounds = array<i64: 1>, scalar_prefetch = 0 : i64, scratch_operands = 0 : i64, tpu.core_type = #tpu.core_type<tc>, window_params = [{transform_indices = @transform_0, window_bounds = array<i64: 8, 128>}, {transform_indices = @transform_1, window_bounds = array<i64: 1, 128>}, {pipeline_mode = #tpu.pipeline_mode<synchronous>, transform_indices = @transform_2, window_bounds = array<i64: 128, 1>}, {pipeline_mode = #tpu.pipeline_mode<synchronous>, transform_indices = @transform_3, window_bounds = array<i64: 128, 32>}, {pipeline_mode = #tpu.pipeline_mode<synchronous>, transform_indices = @transform_4, window_bounds = array<i64: 128, 1>}, {pipeline_mode = #tpu.pipeline_mode<synchronous>, transform_indices = @transform_5, window_bounds = array<i64: 8, 32>}, {pipeline_mode = #tpu.pipeline_mode<synchronous>, transform_indices = @transform_6, window_bounds = array<i64: 8, 1>}, {transform_indices = @transform_7, window_bounds = array<i64: 8, 128>}]} {
    %c0 = arith.constant 0 : index
    %c0_0 = arith.constant 0 : index
    %0 = vector.load %arg3[%c0, %c0_0] : memref<128x1xf32, #tpu.memory_space<vmem>>, vector<128x1xf32>
    %c0_1 = arith.constant 0 : index
    %c0_2 = arith.constant 0 : index
    %1 = vector.load %arg4[%c0_1, %c0_2] : memref<128x32xf32, #tpu.memory_space<vmem>>, vector<128x32xf32>
    %c0_3 = arith.constant 0 : index
    %c0_4 = arith.constant 0 : index
    %2 = vector.load %arg5[%c0_3, %c0_4] : memref<128x1xf32, #tpu.memory_space<vmem>>, vector<128x1xf32>
    %c0_5 = arith.constant 0 : index
    %c0_6 = arith.constant 0 : index
    %3 = vector.load %arg6[%c0_5, %c0_6] : memref<8x32xf32, #tpu.memory_space<vmem>>, vector<8x32xf32>
    %c0_7 = arith.constant 0 : index
    %c0_8 = arith.constant 0 : index
    %4 = vector.load %arg7[%c0_7, %c0_8] : memref<8x1xf32, #tpu.memory_space<vmem>>, vector<8x1xf32>
    %c0_9 = arith.constant 0 : index
    %c0_10 = arith.constant 0 : index
    %5 = vector.load %arg1[%c0_9, %c0_10] : memref<8x128xf32, #tpu.memory_space<vmem>>, vector<8x128xf32>
    %c0_11 = arith.constant 0 : index
    %c0_12 = arith.constant 0 : index
    %6 = vector.load %arg2[%c0_11, %c0_12] : memref<1x128xi32, #tpu.memory_space<vmem>>, vector<1x128xi32>
    %cst = arith.constant 0.000000e+00 : f32
    %7 = vector.broadcast %cst : f32 to vector<32x128xf32>
    %cst_13 = arith.constant 0.000000e+00 : f32
    %8 = vector.broadcast %cst_13 : f32 to vector<32x128xf32>
    %9 = vector.extract_strided_slice %5 {offsets = [0, 0], sizes = [1, 128], strides = [1, 1]} : vector<8x128xf32> to vector<1x128xf32>
    %10 = vector.broadcast %0 : vector<128x1xf32> to vector<128x128xf32>
    %11 = vector.broadcast %9 : vector<1x128xf32> to vector<128x128xf32>
    %12 = arith.mulf %10, %11 : vector<128x128xf32>
    %13 = vector.broadcast %2 : vector<128x1xf32> to vector<128x128xf32>
    %14 = arith.addf %12, %13 : vector<128x128xf32>
    %cst_14 = arith.constant dense<0.000000e+00> : vector<128x128xf32>
    %15 = tpu.matmul %1, %7, %cst_14 {dimension_numbers = #tpu.dot_dimension_numbers<[1], [0], [0], [1], [0, 0, 1, 1], [], []>} : vector<128x32xf32>, vector<32x128xf32>, vector<128x128xf32> -> vector<128x128xf32>
    %16 = arith.addf %14, %15 : vector<128x128xf32>
    %17 = math.tanh %16 : vector<128x128xf32>
    %18 = vector.extract_strided_slice %17 {offsets = [0, 0], sizes = [32, 128], strides = [1, 1]} : vector<128x128xf32> to vector<32x128xf32>
    %cst_15 = arith.constant 5.000000e-01 : f32
    %19 = vector.broadcast %cst_15 : f32 to vector<32x128xf32>
    %20 = arith.mulf %19, %18 : vector<32x128xf32>
    %cst_16 = arith.constant 5.000000e-01 : f32
    %21 = vector.broadcast %cst_16 : f32 to vector<32x128xf32>
    %22 = arith.addf %20, %21 : vector<32x128xf32>
    %23 = vector.extract_strided_slice %17 {offsets = [32, 0], sizes = [32, 128], strides = [1, 1]} : vector<128x128xf32> to vector<32x128xf32>
    %cst_17 = arith.constant 5.000000e-01 : f32
    %24 = vector.broadcast %cst_17 : f32 to vector<32x128xf32>
    %25 = arith.mulf %24, %23 : vector<32x128xf32>
    %cst_18 = arith.constant 5.000000e-01 : f32
    %26 = vector.broadcast %cst_18 : f32 to vector<32x128xf32>
    %27 = arith.addf %25, %26 : vector<32x128xf32>
    %28 = vector.extract_strided_slice %17 {offsets = [64, 0], sizes = [32, 128], strides = [1, 1]} : vector<128x128xf32> to vector<32x128xf32>
    %29 = vector.extract_strided_slice %17 {offsets = [96, 0], sizes = [32, 128], strides = [1, 1]} : vector<128x128xf32> to vector<32x128xf32>
    %cst_19 = arith.constant 5.000000e-01 : f32
    %30 = vector.broadcast %cst_19 : f32 to vector<32x128xf32>
    %31 = arith.mulf %30, %29 : vector<32x128xf32>
    %cst_20 = arith.constant 5.000000e-01 : f32
    %32 = vector.broadcast %cst_20 : f32 to vector<32x128xf32>
    %33 = arith.addf %31, %32 : vector<32x128xf32>
    %34 = arith.mulf %27, %8 : vector<32x128xf32>
    %35 = arith.mulf %22, %28 : vector<32x128xf32>
    %36 = arith.addf %34, %35 : vector<32x128xf32>
    %37 = math.tanh %36 : vector<32x128xf32>
    %38 = arith.mulf %33, %37 : vector<32x128xf32>
    %c0_i32 = arith.constant 0 : i32
    %39 = vector.broadcast %c0_i32 : i32 to vector<1x128xi32>
    %40 = arith.cmpi sgt, %6, %39 : vector<1x128xi32>
    %41 = vector.shape_cast %40 : vector<1x128xi1> to vector<1x128xi1>
    %42 = vector.broadcast %41 : vector<1x128xi1> to vector<32x128xi1>
    %43 = arith.select %42, %38, %7 : vector<32x128xi1>, vector<32x128xf32>
    %44 = vector.shape_cast %40 : vector<1x128xi1> to vector<1x128xi1>
    %45 = vector.broadcast %44 : vector<1x128xi1> to vector<32x128xi1>
    %46 = arith.select %45, %36, %8 : vector<32x128xi1>, vector<32x128xf32>
    %47 = vector.extract_strided_slice %5 {offsets = [1, 0], sizes = [1, 128], strides = [1, 1]} : vector<8x128xf32> to vector<1x128xf32>
    %48 = vector.broadcast %0 : vector<128x1xf32> to vector<128x128xf32>
    %49 = vector.broadcast %47 : vector<1x128xf32> to vector<128x128xf32>
    %50 = arith.mulf %48, %49 : vector<128x128xf32>
    %51 = vector.broadcast %2 : vector<128x1xf32> to vector<128x128xf32>
    %52 = arith.addf %50, %51 : vector<128x128xf32>
    %cst_21 = arith.constant dense<0.000000e+00> : vector<128x128xf32>
    %53 = tpu.matmul %1, %43, %cst_21 {dimension_numbers = #tpu.dot_dimension_numbers<[1], [0], [0], [1], [0, 0, 1, 1], [], []>} : vector<128x32xf32>, vector<32x128xf32>, vector<128x128xf32> -> vector<128x128xf32>
    %54 = arith.addf %52, %53 : vector<128x128xf32>
    %55 = math.tanh %54 : vector<128x128xf32>
    %56 = vector.extract_strided_slice %55 {offsets = [0, 0], sizes = [32, 128], strides = [1, 1]} : vector<128x128xf32> to vector<32x128xf32>
    %cst_22 = arith.constant 5.000000e-01 : f32
    %57 = vector.broadcast %cst_22 : f32 to vector<32x128xf32>
    %58 = arith.mulf %57, %56 : vector<32x128xf32>
    %cst_23 = arith.constant 5.000000e-01 : f32
    %59 = vector.broadcast %cst_23 : f32 to vector<32x128xf32>
    %60 = arith.addf %58, %59 : vector<32x128xf32>
    %61 = vector.extract_strided_slice %55 {offsets = [32, 0], sizes = [32, 128], strides = [1, 1]} : vector<128x128xf32> to vector<32x128xf32>
    %cst_24 = arith.constant 5.000000e-01 : f32
    %62 = vector.broadcast %cst_24 : f32 to vector<32x128xf32>
    %63 = arith.mulf %62, %61 : vector<32x128xf32>
    %cst_25 = arith.constant 5.000000e-01 : f32
    %64 = vector.broadcast %cst_25 : f32 to vector<32x128xf32>
    %65 = arith.addf %63, %64 : vector<32x128xf32>
    %66 = vector.extract_strided_slice %55 {offsets = [64, 0], sizes = [32, 128], strides = [1, 1]} : vector<128x128xf32> to vector<32x128xf32>
    %67 = vector.extract_strided_slice %55 {offsets = [96, 0], sizes = [32, 128], strides = [1, 1]} : vector<128x128xf32> to vector<32x128xf32>
    %cst_26 = arith.constant 5.000000e-01 : f32
    %68 = vector.broadcast %cst_26 : f32 to vector<32x128xf32>
    %69 = arith.mulf %68, %67 : vector<32x128xf32>
    %cst_27 = arith.constant 5.000000e-01 : f32
    %70 = vector.broadcast %cst_27 : f32 to vector<32x128xf32>
    %71 = arith.addf %69, %70 : vector<32x128xf32>
    %72 = arith.mulf %65, %46 : vector<32x128xf32>
    %73 = arith.mulf %60, %66 : vector<32x128xf32>
    %74 = arith.addf %72, %73 : vector<32x128xf32>
    %75 = math.tanh %74 : vector<32x128xf32>
    %76 = arith.mulf %71, %75 : vector<32x128xf32>
    %c1_i32 = arith.constant 1 : i32
    %77 = vector.broadcast %c1_i32 : i32 to vector<1x128xi32>
    %78 = arith.cmpi sgt, %6, %77 : vector<1x128xi32>
    %79 = vector.shape_cast %78 : vector<1x128xi1> to vector<1x128xi1>
    %80 = vector.broadcast %79 : vector<1x128xi1> to vector<32x128xi1>
    %81 = arith.select %80, %76, %43 : vector<32x128xi1>, vector<32x128xf32>
    %82 = vector.shape_cast %78 : vector<1x128xi1> to vector<1x128xi1>
    %83 = vector.broadcast %82 : vector<1x128xi1> to vector<32x128xi1>
    %84 = arith.select %83, %74, %46 : vector<32x128xi1>, vector<32x128xf32>
    %85 = vector.extract_strided_slice %5 {offsets = [2, 0], sizes = [1, 128], strides = [1, 1]} : vector<8x128xf32> to vector<1x128xf32>
    %86 = vector.broadcast %0 : vector<128x1xf32> to vector<128x128xf32>
    %87 = vector.broadcast %85 : vector<1x128xf32> to vector<128x128xf32>
    %88 = arith.mulf %86, %87 : vector<128x128xf32>
    %89 = vector.broadcast %2 : vector<128x1xf32> to vector<128x128xf32>
    %90 = arith.addf %88, %89 : vector<128x128xf32>
    %cst_28 = arith.constant dense<0.000000e+00> : vector<128x128xf32>
    %91 = tpu.matmul %1, %81, %cst_28 {dimension_numbers = #tpu.dot_dimension_numbers<[1], [0], [0], [1], [0, 0, 1, 1], [], []>} : vector<128x32xf32>, vector<32x128xf32>, vector<128x128xf32> -> vector<128x128xf32>
    %92 = arith.addf %90, %91 : vector<128x128xf32>
    %93 = math.tanh %92 : vector<128x128xf32>
    %94 = vector.extract_strided_slice %93 {offsets = [0, 0], sizes = [32, 128], strides = [1, 1]} : vector<128x128xf32> to vector<32x128xf32>
    %cst_29 = arith.constant 5.000000e-01 : f32
    %95 = vector.broadcast %cst_29 : f32 to vector<32x128xf32>
    %96 = arith.mulf %95, %94 : vector<32x128xf32>
    %cst_30 = arith.constant 5.000000e-01 : f32
    %97 = vector.broadcast %cst_30 : f32 to vector<32x128xf32>
    %98 = arith.addf %96, %97 : vector<32x128xf32>
    %99 = vector.extract_strided_slice %93 {offsets = [32, 0], sizes = [32, 128], strides = [1, 1]} : vector<128x128xf32> to vector<32x128xf32>
    %cst_31 = arith.constant 5.000000e-01 : f32
    %100 = vector.broadcast %cst_31 : f32 to vector<32x128xf32>
    %101 = arith.mulf %100, %99 : vector<32x128xf32>
    %cst_32 = arith.constant 5.000000e-01 : f32
    %102 = vector.broadcast %cst_32 : f32 to vector<32x128xf32>
    %103 = arith.addf %101, %102 : vector<32x128xf32>
    %104 = vector.extract_strided_slice %93 {offsets = [64, 0], sizes = [32, 128], strides = [1, 1]} : vector<128x128xf32> to vector<32x128xf32>
    %105 = vector.extract_strided_slice %93 {offsets = [96, 0], sizes = [32, 128], strides = [1, 1]} : vector<128x128xf32> to vector<32x128xf32>
    %cst_33 = arith.constant 5.000000e-01 : f32
    %106 = vector.broadcast %cst_33 : f32 to vector<32x128xf32>
    %107 = arith.mulf %106, %105 : vector<32x128xf32>
    %cst_34 = arith.constant 5.000000e-01 : f32
    %108 = vector.broadcast %cst_34 : f32 to vector<32x128xf32>
    %109 = arith.addf %107, %108 : vector<32x128xf32>
    %110 = arith.mulf %103, %84 : vector<32x128xf32>
    %111 = arith.mulf %98, %104 : vector<32x128xf32>
    %112 = arith.addf %110, %111 : vector<32x128xf32>
    %113 = math.tanh %112 : vector<32x128xf32>
    %114 = arith.mulf %109, %113 : vector<32x128xf32>
    %c2_i32 = arith.constant 2 : i32
    %115 = vector.broadcast %c2_i32 : i32 to vector<1x128xi32>
    %116 = arith.cmpi sgt, %6, %115 : vector<1x128xi32>
    %117 = vector.shape_cast %116 : vector<1x128xi1> to vector<1x128xi1>
    %118 = vector.broadcast %117 : vector<1x128xi1> to vector<32x128xi1>
    %119 = arith.select %118, %114, %81 : vector<32x128xi1>, vector<32x128xf32>
    %120 = vector.shape_cast %116 : vector<1x128xi1> to vector<1x128xi1>
    %121 = vector.broadcast %120 : vector<1x128xi1> to vector<32x128xi1>
    %122 = arith.select %121, %112, %84 : vector<32x128xi1>, vector<32x128xf32>
    %123 = vector.extract_strided_slice %5 {offsets = [3, 0], sizes = [1, 128], strides = [1, 1]} : vector<8x128xf32> to vector<1x128xf32>
    %124 = vector.broadcast %0 : vector<128x1xf32> to vector<128x128xf32>
    %125 = vector.broadcast %123 : vector<1x128xf32> to vector<128x128xf32>
    %126 = arith.mulf %124, %125 : vector<128x128xf32>
    %127 = vector.broadcast %2 : vector<128x1xf32> to vector<128x128xf32>
    %128 = arith.addf %126, %127 : vector<128x128xf32>
    %cst_35 = arith.constant dense<0.000000e+00> : vector<128x128xf32>
    %129 = tpu.matmul %1, %119, %cst_35 {dimension_numbers = #tpu.dot_dimension_numbers<[1], [0], [0], [1], [0, 0, 1, 1], [], []>} : vector<128x32xf32>, vector<32x128xf32>, vector<128x128xf32> -> vector<128x128xf32>
    %130 = arith.addf %128, %129 : vector<128x128xf32>
    %131 = math.tanh %130 : vector<128x128xf32>
    %132 = vector.extract_strided_slice %131 {offsets = [0, 0], sizes = [32, 128], strides = [1, 1]} : vector<128x128xf32> to vector<32x128xf32>
    %cst_36 = arith.constant 5.000000e-01 : f32
    %133 = vector.broadcast %cst_36 : f32 to vector<32x128xf32>
    %134 = arith.mulf %133, %132 : vector<32x128xf32>
    %cst_37 = arith.constant 5.000000e-01 : f32
    %135 = vector.broadcast %cst_37 : f32 to vector<32x128xf32>
    %136 = arith.addf %134, %135 : vector<32x128xf32>
    %137 = vector.extract_strided_slice %131 {offsets = [32, 0], sizes = [32, 128], strides = [1, 1]} : vector<128x128xf32> to vector<32x128xf32>
    %cst_38 = arith.constant 5.000000e-01 : f32
    %138 = vector.broadcast %cst_38 : f32 to vector<32x128xf32>
    %139 = arith.mulf %138, %137 : vector<32x128xf32>
    %cst_39 = arith.constant 5.000000e-01 : f32
    %140 = vector.broadcast %cst_39 : f32 to vector<32x128xf32>
    %141 = arith.addf %139, %140 : vector<32x128xf32>
    %142 = vector.extract_strided_slice %131 {offsets = [64, 0], sizes = [32, 128], strides = [1, 1]} : vector<128x128xf32> to vector<32x128xf32>
    %143 = vector.extract_strided_slice %131 {offsets = [96, 0], sizes = [32, 128], strides = [1, 1]} : vector<128x128xf32> to vector<32x128xf32>
    %cst_40 = arith.constant 5.000000e-01 : f32
    %144 = vector.broadcast %cst_40 : f32 to vector<32x128xf32>
    %145 = arith.mulf %144, %143 : vector<32x128xf32>
    %cst_41 = arith.constant 5.000000e-01 : f32
    %146 = vector.broadcast %cst_41 : f32 to vector<32x128xf32>
    %147 = arith.addf %145, %146 : vector<32x128xf32>
    %148 = arith.mulf %141, %122 : vector<32x128xf32>
    %149 = arith.mulf %136, %142 : vector<32x128xf32>
    %150 = arith.addf %148, %149 : vector<32x128xf32>
    %151 = math.tanh %150 : vector<32x128xf32>
    %152 = arith.mulf %147, %151 : vector<32x128xf32>
    %c3_i32 = arith.constant 3 : i32
    %153 = vector.broadcast %c3_i32 : i32 to vector<1x128xi32>
    %154 = arith.cmpi sgt, %6, %153 : vector<1x128xi32>
    %155 = vector.shape_cast %154 : vector<1x128xi1> to vector<1x128xi1>
    %156 = vector.broadcast %155 : vector<1x128xi1> to vector<32x128xi1>
    %157 = arith.select %156, %152, %119 : vector<32x128xi1>, vector<32x128xf32>
    %158 = vector.shape_cast %154 : vector<1x128xi1> to vector<1x128xi1>
    %159 = vector.broadcast %158 : vector<1x128xi1> to vector<32x128xi1>
    %160 = arith.select %159, %150, %122 : vector<32x128xi1>, vector<32x128xf32>
    %161 = vector.extract_strided_slice %5 {offsets = [4, 0], sizes = [1, 128], strides = [1, 1]} : vector<8x128xf32> to vector<1x128xf32>
    %162 = vector.broadcast %0 : vector<128x1xf32> to vector<128x128xf32>
    %163 = vector.broadcast %161 : vector<1x128xf32> to vector<128x128xf32>
    %164 = arith.mulf %162, %163 : vector<128x128xf32>
    %165 = vector.broadcast %2 : vector<128x1xf32> to vector<128x128xf32>
    %166 = arith.addf %164, %165 : vector<128x128xf32>
    %cst_42 = arith.constant dense<0.000000e+00> : vector<128x128xf32>
    %167 = tpu.matmul %1, %157, %cst_42 {dimension_numbers = #tpu.dot_dimension_numbers<[1], [0], [0], [1], [0, 0, 1, 1], [], []>} : vector<128x32xf32>, vector<32x128xf32>, vector<128x128xf32> -> vector<128x128xf32>
    %168 = arith.addf %166, %167 : vector<128x128xf32>
    %169 = math.tanh %168 : vector<128x128xf32>
    %170 = vector.extract_strided_slice %169 {offsets = [0, 0], sizes = [32, 128], strides = [1, 1]} : vector<128x128xf32> to vector<32x128xf32>
    %cst_43 = arith.constant 5.000000e-01 : f32
    %171 = vector.broadcast %cst_43 : f32 to vector<32x128xf32>
    %172 = arith.mulf %171, %170 : vector<32x128xf32>
    %cst_44 = arith.constant 5.000000e-01 : f32
    %173 = vector.broadcast %cst_44 : f32 to vector<32x128xf32>
    %174 = arith.addf %172, %173 : vector<32x128xf32>
    %175 = vector.extract_strided_slice %169 {offsets = [32, 0], sizes = [32, 128], strides = [1, 1]} : vector<128x128xf32> to vector<32x128xf32>
    %cst_45 = arith.constant 5.000000e-01 : f32
    %176 = vector.broadcast %cst_45 : f32 to vector<32x128xf32>
    %177 = arith.mulf %176, %175 : vector<32x128xf32>
    %cst_46 = arith.constant 5.000000e-01 : f32
    %178 = vector.broadcast %cst_46 : f32 to vector<32x128xf32>
    %179 = arith.addf %177, %178 : vector<32x128xf32>
    %180 = vector.extract_strided_slice %169 {offsets = [64, 0], sizes = [32, 128], strides = [1, 1]} : vector<128x128xf32> to vector<32x128xf32>
    %181 = vector.extract_strided_slice %169 {offsets = [96, 0], sizes = [32, 128], strides = [1, 1]} : vector<128x128xf32> to vector<32x128xf32>
    %cst_47 = arith.constant 5.000000e-01 : f32
    %182 = vector.broadcast %cst_47 : f32 to vector<32x128xf32>
    %183 = arith.mulf %182, %181 : vector<32x128xf32>
    %cst_48 = arith.constant 5.000000e-01 : f32
    %184 = vector.broadcast %cst_48 : f32 to vector<32x128xf32>
    %185 = arith.addf %183, %184 : vector<32x128xf32>
    %186 = arith.mulf %179, %160 : vector<32x128xf32>
    %187 = arith.mulf %174, %180 : vector<32x128xf32>
    %188 = arith.addf %186, %187 : vector<32x128xf32>
    %189 = math.tanh %188 : vector<32x128xf32>
    %190 = arith.mulf %185, %189 : vector<32x128xf32>
    %c4_i32 = arith.constant 4 : i32
    %191 = vector.broadcast %c4_i32 : i32 to vector<1x128xi32>
    %192 = arith.cmpi sgt, %6, %191 : vector<1x128xi32>
    %193 = vector.shape_cast %192 : vector<1x128xi1> to vector<1x128xi1>
    %194 = vector.broadcast %193 : vector<1x128xi1> to vector<32x128xi1>
    %195 = arith.select %194, %190, %157 : vector<32x128xi1>, vector<32x128xf32>
    %196 = vector.shape_cast %192 : vector<1x128xi1> to vector<1x128xi1>
    %197 = vector.broadcast %196 : vector<1x128xi1> to vector<32x128xi1>
    %198 = arith.select %197, %188, %160 : vector<32x128xi1>, vector<32x128xf32>
    %199 = vector.extract_strided_slice %5 {offsets = [5, 0], sizes = [1, 128], strides = [1, 1]} : vector<8x128xf32> to vector<1x128xf32>
    %200 = vector.broadcast %0 : vector<128x1xf32> to vector<128x128xf32>
    %201 = vector.broadcast %199 : vector<1x128xf32> to vector<128x128xf32>
    %202 = arith.mulf %200, %201 : vector<128x128xf32>
    %203 = vector.broadcast %2 : vector<128x1xf32> to vector<128x128xf32>
    %204 = arith.addf %202, %203 : vector<128x128xf32>
    %cst_49 = arith.constant dense<0.000000e+00> : vector<128x128xf32>
    %205 = tpu.matmul %1, %195, %cst_49 {dimension_numbers = #tpu.dot_dimension_numbers<[1], [0], [0], [1], [0, 0, 1, 1], [], []>} : vector<128x32xf32>, vector<32x128xf32>, vector<128x128xf32> -> vector<128x128xf32>
    %206 = arith.addf %204, %205 : vector<128x128xf32>
    %207 = math.tanh %206 : vector<128x128xf32>
    %208 = vector.extract_strided_slice %207 {offsets = [0, 0], sizes = [32, 128], strides = [1, 1]} : vector<128x128xf32> to vector<32x128xf32>
    %cst_50 = arith.constant 5.000000e-01 : f32
    %209 = vector.broadcast %cst_50 : f32 to vector<32x128xf32>
    %210 = arith.mulf %209, %208 : vector<32x128xf32>
    %cst_51 = arith.constant 5.000000e-01 : f32
    %211 = vector.broadcast %cst_51 : f32 to vector<32x128xf32>
    %212 = arith.addf %210, %211 : vector<32x128xf32>
    %213 = vector.extract_strided_slice %207 {offsets = [32, 0], sizes = [32, 128], strides = [1, 1]} : vector<128x128xf32> to vector<32x128xf32>
    %cst_52 = arith.constant 5.000000e-01 : f32
    %214 = vector.broadcast %cst_52 : f32 to vector<32x128xf32>
    %215 = arith.mulf %214, %213 : vector<32x128xf32>
    %cst_53 = arith.constant 5.000000e-01 : f32
    %216 = vector.broadcast %cst_53 : f32 to vector<32x128xf32>
    %217 = arith.addf %215, %216 : vector<32x128xf32>
    %218 = vector.extract_strided_slice %207 {offsets = [64, 0], sizes = [32, 128], strides = [1, 1]} : vector<128x128xf32> to vector<32x128xf32>
    %219 = vector.extract_strided_slice %207 {offsets = [96, 0], sizes = [32, 128], strides = [1, 1]} : vector<128x128xf32> to vector<32x128xf32>
    %cst_54 = arith.constant 5.000000e-01 : f32
    %220 = vector.broadcast %cst_54 : f32 to vector<32x128xf32>
    %221 = arith.mulf %220, %219 : vector<32x128xf32>
    %cst_55 = arith.constant 5.000000e-01 : f32
    %222 = vector.broadcast %cst_55 : f32 to vector<32x128xf32>
    %223 = arith.addf %221, %222 : vector<32x128xf32>
    %224 = arith.mulf %217, %198 : vector<32x128xf32>
    %225 = arith.mulf %212, %218 : vector<32x128xf32>
    %226 = arith.addf %224, %225 : vector<32x128xf32>
    %227 = math.tanh %226 : vector<32x128xf32>
    %228 = arith.mulf %223, %227 : vector<32x128xf32>
    %c5_i32 = arith.constant 5 : i32
    %229 = vector.broadcast %c5_i32 : i32 to vector<1x128xi32>
    %230 = arith.cmpi sgt, %6, %229 : vector<1x128xi32>
    %231 = vector.shape_cast %230 : vector<1x128xi1> to vector<1x128xi1>
    %232 = vector.broadcast %231 : vector<1x128xi1> to vector<32x128xi1>
    %233 = arith.select %232, %228, %195 : vector<32x128xi1>, vector<32x128xf32>
    %234 = vector.shape_cast %230 : vector<1x128xi1> to vector<1x128xi1>
    %235 = vector.broadcast %234 : vector<1x128xi1> to vector<32x128xi1>
    %236 = arith.select %235, %226, %198 : vector<32x128xi1>, vector<32x128xf32>
    %237 = vector.extract_strided_slice %5 {offsets = [6, 0], sizes = [1, 128], strides = [1, 1]} : vector<8x128xf32> to vector<1x128xf32>
    %238 = vector.broadcast %0 : vector<128x1xf32> to vector<128x128xf32>
    %239 = vector.broadcast %237 : vector<1x128xf32> to vector<128x128xf32>
    %240 = arith.mulf %238, %239 : vector<128x128xf32>
    %241 = vector.broadcast %2 : vector<128x1xf32> to vector<128x128xf32>
    %242 = arith.addf %240, %241 : vector<128x128xf32>
    %cst_56 = arith.constant dense<0.000000e+00> : vector<128x128xf32>
    %243 = tpu.matmul %1, %233, %cst_56 {dimension_numbers = #tpu.dot_dimension_numbers<[1], [0], [0], [1], [0, 0, 1, 1], [], []>} : vector<128x32xf32>, vector<32x128xf32>, vector<128x128xf32> -> vector<128x128xf32>
    %244 = arith.addf %242, %243 : vector<128x128xf32>
    %245 = math.tanh %244 : vector<128x128xf32>
    %246 = vector.extract_strided_slice %245 {offsets = [0, 0], sizes = [32, 128], strides = [1, 1]} : vector<128x128xf32> to vector<32x128xf32>
    %cst_57 = arith.constant 5.000000e-01 : f32
    %247 = vector.broadcast %cst_57 : f32 to vector<32x128xf32>
    %248 = arith.mulf %247, %246 : vector<32x128xf32>
    %cst_58 = arith.constant 5.000000e-01 : f32
    %249 = vector.broadcast %cst_58 : f32 to vector<32x128xf32>
    %250 = arith.addf %248, %249 : vector<32x128xf32>
    %251 = vector.extract_strided_slice %245 {offsets = [32, 0], sizes = [32, 128], strides = [1, 1]} : vector<128x128xf32> to vector<32x128xf32>
    %cst_59 = arith.constant 5.000000e-01 : f32
    %252 = vector.broadcast %cst_59 : f32 to vector<32x128xf32>
    %253 = arith.mulf %252, %251 : vector<32x128xf32>
    %cst_60 = arith.constant 5.000000e-01 : f32
    %254 = vector.broadcast %cst_60 : f32 to vector<32x128xf32>
    %255 = arith.addf %253, %254 : vector<32x128xf32>
    %256 = vector.extract_strided_slice %245 {offsets = [64, 0], sizes = [32, 128], strides = [1, 1]} : vector<128x128xf32> to vector<32x128xf32>
    %257 = vector.extract_strided_slice %245 {offsets = [96, 0], sizes = [32, 128], strides = [1, 1]} : vector<128x128xf32> to vector<32x128xf32>
    %cst_61 = arith.constant 5.000000e-01 : f32
    %258 = vector.broadcast %cst_61 : f32 to vector<32x128xf32>
    %259 = arith.mulf %258, %257 : vector<32x128xf32>
    %cst_62 = arith.constant 5.000000e-01 : f32
    %260 = vector.broadcast %cst_62 : f32 to vector<32x128xf32>
    %261 = arith.addf %259, %260 : vector<32x128xf32>
    %262 = arith.mulf %255, %236 : vector<32x128xf32>
    %263 = arith.mulf %250, %256 : vector<32x128xf32>
    %264 = arith.addf %262, %263 : vector<32x128xf32>
    %265 = math.tanh %264 : vector<32x128xf32>
    %266 = arith.mulf %261, %265 : vector<32x128xf32>
    %c6_i32 = arith.constant 6 : i32
    %267 = vector.broadcast %c6_i32 : i32 to vector<1x128xi32>
    %268 = arith.cmpi sgt, %6, %267 : vector<1x128xi32>
    %269 = vector.shape_cast %268 : vector<1x128xi1> to vector<1x128xi1>
    %270 = vector.broadcast %269 : vector<1x128xi1> to vector<32x128xi1>
    %271 = arith.select %270, %266, %233 : vector<32x128xi1>, vector<32x128xf32>
    %272 = vector.shape_cast %268 : vector<1x128xi1> to vector<1x128xi1>
    %273 = vector.broadcast %272 : vector<1x128xi1> to vector<32x128xi1>
    %274 = arith.select %273, %264, %236 : vector<32x128xi1>, vector<32x128xf32>
    %275 = vector.extract_strided_slice %5 {offsets = [7, 0], sizes = [1, 128], strides = [1, 1]} : vector<8x128xf32> to vector<1x128xf32>
    %276 = vector.broadcast %0 : vector<128x1xf32> to vector<128x128xf32>
    %277 = vector.broadcast %275 : vector<1x128xf32> to vector<128x128xf32>
    %278 = arith.mulf %276, %277 : vector<128x128xf32>
    %279 = vector.broadcast %2 : vector<128x1xf32> to vector<128x128xf32>
    %280 = arith.addf %278, %279 : vector<128x128xf32>
    %cst_63 = arith.constant dense<0.000000e+00> : vector<128x128xf32>
    %281 = tpu.matmul %1, %271, %cst_63 {dimension_numbers = #tpu.dot_dimension_numbers<[1], [0], [0], [1], [0, 0, 1, 1], [], []>} : vector<128x32xf32>, vector<32x128xf32>, vector<128x128xf32> -> vector<128x128xf32>
    %282 = arith.addf %280, %281 : vector<128x128xf32>
    %283 = math.tanh %282 : vector<128x128xf32>
    %284 = vector.extract_strided_slice %283 {offsets = [0, 0], sizes = [32, 128], strides = [1, 1]} : vector<128x128xf32> to vector<32x128xf32>
    %cst_64 = arith.constant 5.000000e-01 : f32
    %285 = vector.broadcast %cst_64 : f32 to vector<32x128xf32>
    %286 = arith.mulf %285, %284 : vector<32x128xf32>
    %cst_65 = arith.constant 5.000000e-01 : f32
    %287 = vector.broadcast %cst_65 : f32 to vector<32x128xf32>
    %288 = arith.addf %286, %287 : vector<32x128xf32>
    %289 = vector.extract_strided_slice %283 {offsets = [32, 0], sizes = [32, 128], strides = [1, 1]} : vector<128x128xf32> to vector<32x128xf32>
    %cst_66 = arith.constant 5.000000e-01 : f32
    %290 = vector.broadcast %cst_66 : f32 to vector<32x128xf32>
    %291 = arith.mulf %290, %289 : vector<32x128xf32>
    %cst_67 = arith.constant 5.000000e-01 : f32
    %292 = vector.broadcast %cst_67 : f32 to vector<32x128xf32>
    %293 = arith.addf %291, %292 : vector<32x128xf32>
    %294 = vector.extract_strided_slice %283 {offsets = [64, 0], sizes = [32, 128], strides = [1, 1]} : vector<128x128xf32> to vector<32x128xf32>
    %295 = vector.extract_strided_slice %283 {offsets = [96, 0], sizes = [32, 128], strides = [1, 1]} : vector<128x128xf32> to vector<32x128xf32>
    %cst_68 = arith.constant 5.000000e-01 : f32
    %296 = vector.broadcast %cst_68 : f32 to vector<32x128xf32>
    %297 = arith.mulf %296, %295 : vector<32x128xf32>
    %cst_69 = arith.constant 5.000000e-01 : f32
    %298 = vector.broadcast %cst_69 : f32 to vector<32x128xf32>
    %299 = arith.addf %297, %298 : vector<32x128xf32>
    %300 = arith.mulf %293, %274 : vector<32x128xf32>
    %301 = arith.mulf %288, %294 : vector<32x128xf32>
    %302 = arith.addf %300, %301 : vector<32x128xf32>
    %303 = math.tanh %302 : vector<32x128xf32>
    %304 = arith.mulf %299, %303 : vector<32x128xf32>
    %c7_i32 = arith.constant 7 : i32
    %305 = vector.broadcast %c7_i32 : i32 to vector<1x128xi32>
    %306 = arith.cmpi sgt, %6, %305 : vector<1x128xi32>
    %307 = vector.shape_cast %306 : vector<1x128xi1> to vector<1x128xi1>
    %308 = vector.broadcast %307 : vector<1x128xi1> to vector<32x128xi1>
    %309 = arith.select %308, %304, %271 : vector<32x128xi1>, vector<32x128xf32>
    %cst_70 = arith.constant dense<0.000000e+00> : vector<8x128xf32>
    %310 = tpu.matmul %3, %309, %cst_70 {dimension_numbers = #tpu.dot_dimension_numbers<[1], [0], [0], [1], [0, 0, 1, 1], [], []>} : vector<8x32xf32>, vector<32x128xf32>, vector<8x128xf32> -> vector<8x128xf32>
    %311 = vector.broadcast %4 : vector<8x1xf32> to vector<8x128xf32>
    %312 = arith.addf %310, %311 : vector<8x128xf32>
    %c0_71 = arith.constant 0 : index
    %c0_72 = arith.constant 0 : index
    %313 = vector.load %arg8[%c0_71, %c0_72] : memref<8x128xf32, #tpu.memory_space<vmem>>, vector<8x128xf32>
    tpu.vector_store %arg8[%c0_71, %c0_72], %312 {strides = array<i32>} : memref<8x128xf32, #tpu.memory_space<vmem>>, vector<8x128xf32>,
    return
  }
  func.func @transform_0(%arg0: i32) -> (i32, i32) {
    %c0_i32 = arith.constant 0 : i32
    %c0_i32_0 = arith.constant 0 : i32
    return %c0_i32, %arg0 : i32, i32
  }
  func.func @transform_1(%arg0: i32) -> (i32, i32) {
    %c0_i32 = arith.constant 0 : i32
    %c0_i32_0 = arith.constant 0 : i32
    return %c0_i32, %arg0 : i32, i32
  }
  func.func @transform_2(%arg0: i32) -> (i32, i32) {
    %c0_i32 = arith.constant 0 : i32
    %c0_i32_0 = arith.constant 0 : i32
    %c0_i32_1 = arith.constant 0 : i32
    return %c0_i32, %c0_i32_0 : i32, i32
  }
  func.func @transform_3(%arg0: i32) -> (i32, i32) {
    %c0_i32 = arith.constant 0 : i32
    %c0_i32_0 = arith.constant 0 : i32
    %c0_i32_1 = arith.constant 0 : i32
    return %c0_i32, %c0_i32_0 : i32, i32
  }
  func.func @transform_4(%arg0: i32) -> (i32, i32) {
    %c0_i32 = arith.constant 0 : i32
    %c0_i32_0 = arith.constant 0 : i32
    %c0_i32_1 = arith.constant 0 : i32
    return %c0_i32, %c0_i32_0 : i32, i32
  }
  func.func @transform_5(%arg0: i32) -> (i32, i32) {
    %c0_i32 = arith.constant 0 : i32
    %c0_i32_0 = arith.constant 0 : i32
    %c0_i32_1 = arith.constant 0 : i32
    return %c0_i32, %c0_i32_0 : i32, i32
  }
  func.func @transform_6(%arg0: i32) -> (i32, i32) {
    %c0_i32 = arith.constant 0 : i32
    %c0_i32_0 = arith.constant 0 : i32
    %c0_i32_1 = arith.constant 0 : i32
    return %c0_i32, %c0_i32_0 : i32, i32
  }
  func.func @transform_7(%arg0: i32) -> (i32, i32) {
    %c0_i32 = arith.constant 0 : i32
    %c0_i32_0 = arith.constant 0 : i32
    return %c0_i32, %arg0 : i32, i32
  }
}

</mosaic_0001>

<llo_original>
// kernel: tpu_custom_call.1
$region0: #{tpu_custom_call.1}
  #allocation0 [shape = 'u32[]', space=smem, size = 0x4, offset = 0x4, fixed_abs, tag = 'smem constant byte address 0x4 - core index']
  #allocation1 [shape = 'u32[144,128]{1,0:T(1,128)}', space=vmem, size = 0x12000, scoped, tag = 'internal scratch']
  %s0 = inlined_call_operand.vmem [shape: f32[8,128], index: 0, kind: input, shape index: {}]
  %s1 = inlined_call_operand.vmem [shape: s32[1,128], index: 1, kind: input, shape index: {}]
  %s2 = inlined_call_operand.vmem [shape: f32[128,1], index: 2, kind: input, shape index: {}]
  %s3 = inlined_call_operand.vmem [shape: f32[128,32], index: 3, kind: input, shape index: {}]
  %s4 = inlined_call_operand.vmem [shape: f32[128,1], index: 4, kind: input, shape index: {}]
  %s5 = inlined_call_operand.vmem [shape: f32[8,32], index: 5, kind: input, shape index: {}]
  %s6 = inlined_call_operand.vmem [shape: f32[8,1], index: 6, kind: input, shape index: {}]
  %s7 = inlined_call_operand.hbm [shape: f32[8,128], index: 7, kind: output, shape index: {}]
  %s8 = sld [smem:[#allocation0]]
  $region38: #{tpu_custom_call.1} parent=0
    _
  %s10 = ssub.s32 1, %s8
  %s11 = scalar_select 0, %s10, %s8
  $region1: #{tpu_custom_call.1} parent=0
    #allocation2 [shape = 'u8[4096]{0}', space=vmem, size = 0x1000, scoped, tag = 'output window, operand 0, single buffered']
    #allocation3 [shape = 's32[1]{0}', space=sflag, size = 0x4, scoped, tag = 'scoped memory for tpu_custom_call.1']
    %12 = vsyncpa [#allocation3], 0
    // Predicated region
    $region2: #{tpu_custom_call.1} parent=1 // pred_check
      _
    $region3: #{tpu_custom_call.1} parent=1 // pred_check_branch
      %14 = sbr.rel (0) target = $region5
    $region4: #{tpu_custom_call.1} parent=1 // pred_region
      _
    $region5: #{tpu_custom_call.1} parent=1 // pred_fallthru
      _
    // Predicated region
    $region6: #{tpu_custom_call.1} parent=1 // pred_check
      _
    $region7: #{tpu_custom_call.1} parent=1 // pred_check_branch
      %16 = sbr.rel (0) target = $region9
    $region8: #{tpu_custom_call.1} parent=1 // pred_region
      _
    $region9: #{tpu_custom_call.1} parent=1 // pred_fallthru
      _
    // Predicated region
    $region10: #{tpu_custom_call.1} parent=1 // pred_check
      _
    $region11: #{tpu_custom_call.1} parent=1 // pred_check_branch
      %18 = sbr.rel (0) target = $region13
    $region12: #{tpu_custom_call.1} parent=1 // pred_region
      _
    $region13: #{tpu_custom_call.1} parent=1 // pred_fallthru
      _
    // Predicated region
    $region14: #{tpu_custom_call.1} parent=1 // pred_check
      _
    $region15: #{tpu_custom_call.1} parent=1 // pred_check_branch
      %20 = sbr.rel (0) target = $region17
    $region16: #{tpu_custom_call.1} parent=1 // pred_region
      _
    $region17: #{tpu_custom_call.1} parent=1 // pred_fallthru
      _
    // Predicated region
    $region18: #{tpu_custom_call.1} parent=1 // pred_check
      _
    $region19: #{tpu_custom_call.1} parent=1 // pred_check_branch
      %22 = sbr.rel (0) target = $region21
    $region20: #{tpu_custom_call.1} parent=1 // pred_region
      _
    $region21: #{tpu_custom_call.1} parent=1 // pred_fallthru
      _
    // Predicated region
    $region22: #{tpu_custom_call.1} parent=1 // pred_check
      _
    $region23: #{tpu_custom_call.1} parent=1 // pred_check_branch
      %24 = sbr.rel (0) target = $region25
    $region24: #{tpu_custom_call.1} parent=1 // pred_region
      _
    $region25: #{tpu_custom_call.1} parent=1 // pred_fallthru
      _
    // Predicated region
    $region26: #{tpu_custom_call.1} parent=1 // pred_check
      _
    $region27: #{tpu_custom_call.1} parent=1 // pred_check_branch
      %26 = sbr.rel (0) target = $region29
    $region28: #{tpu_custom_call.1} parent=1 // pred_region
      _
    $region29: #{tpu_custom_call.1} parent=1 // pred_fallthru
      _
    %v27 = vld [vmem:[%s2] sm:$0xff]
    %v28 = vld [vmem:[%s2 + $0x8] sm:$0xff]
    %v29 = vld [vmem:[%s2 + $0x10] sm:$0xff]
    %v30 = vld [vmem:[%s2 + $0x18] sm:$0xff]
    %v31 = vld [vmem:[%s2 + $0x20] sm:$0xff]
    %v32 = vld [vmem:[%s2 + $0x28] sm:$0xff]
    %v33 = vld [vmem:[%s2 + $0x30] sm:$0xff]
    %v34 = vld [vmem:[%s2 + $0x38] sm:$0xff]
    %v35 = vld [vmem:[%s2 + $0x40] sm:$0xff]
    %v36 = vld [vmem:[%s2 + $0x48] sm:$0xff]
    %v37 = vld [vmem:[%s2 + $0x50] sm:$0xff]
    %v38 = vld [vmem:[%s2 + $0x58] sm:$0xff]
    %v39 = vld [vmem:[%s2 + $0x60] sm:$0xff]
    %v40 = vld [vmem:[%s2 + $0x68] sm:$0xff]
    %v41 = vld [vmem:[%s2 + $0x70] sm:$0xff]
    %v42 = vld [vmem:[%s2 + $0x78] sm:$0xff]
    %v43 = vld [vmem:[%s3] sm:$0xff]
    %v44 = vld [vmem:[%s3 + $0x8] sm:$0xff]
    %v45 = vld [vmem:[%s3 + $0x10] sm:$0xff]
    %v46 = vld [vmem:[%s3 + $0x18] sm:$0xff]
    %v47 = vld [vmem:[%s3 + $0x20] sm:$0xff]
    %v48 = vld [vmem:[%s3 + $0x28] sm:$0xff]
    %v49 = vld [vmem:[%s3 + $0x30] sm:$0xff]
    %v50 = vld [vmem:[%s3 + $0x38] sm:$0xff]
    %v51 = vld [vmem:[%s3 + $0x40] sm:$0xff]
    %v52 = vld [vmem:[%s3 + $0x48] sm:$0xff]
    %v53 = vld [vmem:[%s3 + $0x50] sm:$0xff]
    %v54 = vld [vmem:[%s3 + $0x58] sm:$0xff]
    %v55 = vld [vmem:[%s3 + $0x60] sm:$0xff]
    %v56 = vld [vmem:[%s3 + $0x68] sm:$0xff]
    %v57 = vld [vmem:[%s3 + $0x70] sm:$0xff]
    %v58 = vld [vmem:[%s3 + $0x78] sm:$0xff]
    %v59 = vld [vmem:[%s4] sm:$0xff]
    %v60 = vld [vmem:[%s4 + $0x8] sm:$0xff]
    %v61 = vld [vmem:[%s4 + $0x10] sm:$0xff]
    %v62 = vld [vmem:[%s4 + $0x18] sm:$0xff]
    %v63 = vld [vmem:[%s4 + $0x20] sm:$0xff]
    %v64 = vld [vmem:[%s4 + $0x28] sm:$0xff]
    %v65 = vld [vmem:[%s4 + $0x30] sm:$0xff]
    %v66 = vld [vmem:[%s4 + $0x38] sm:$0xff]
    %v67 = vld [vmem:[%s4 + $0x40] sm:$0xff]
    %v68 = vld [vmem:[%s4 + $0x48] sm:$0xff]
    %v69 = vld [vmem:[%s4 + $0x50] sm:$0xff]
    %v70 = vld [vmem:[%s4 + $0x58] sm:$0xff]
    %v71 = vld [vmem:[%s4 + $0x60] sm:$0xff]
    %v72 = vld [vmem:[%s4 + $0x68] sm:$0xff]
    %v73 = vld [vmem:[%s4 + $0x70] sm:$0xff]
    %v74 = vld [vmem:[%s4 + $0x78] sm:$0xff]
    %v75 = vld [vmem:[%s5] sm:$0xff]
    %v76 = vld [vmem:[%s6] sm:$0xff]
    %v77 = vld [vmem:[%s0] sm:$0xff]
    %v78 = vld [vmem:[%s1] sm:$0x1]
    %80 = vset.pattern.permute.xlu0 0
    %81 = vperm.xlu0 %80, %v27
    %v82 = vpop.permute.xlu0 %81
    %85 = vset.pattern.permute.xlu0 0
    %86 = vperm.xlu0 %85, %v28
    %v87 = vpop.permute.xlu0 %86
    %90 = vset.pattern.permute.xlu0 0
    %91 = vperm.xlu0 %90, %v29
    %v92 = vpop.permute.xlu0 %91
    %95 = vset.pattern.permute.xlu0 0
    %96 = vperm.xlu0 %95, %v30
    %v97 = vpop.permute.xlu0 %96
    %100 = vset.pattern.permute.xlu0 0
    %101 = vperm.xlu0 %100, %v31
    %v102 = vpop.permute.xlu0 %101
    %105 = vset.pattern.permute.xlu0 0
    %106 = vperm.xlu0 %105, %v32
    %v107 = vpop.permute.xlu0 %106
    %110 = vset.pattern.permute.xlu0 0
    %111 = vperm.xlu0 %110, %v33
    %v112 = vpop.permute.xlu0 %111
    %115 = vset.pattern.permute.xlu0 0
    %116 = vperm.xlu0 %115, %v34
    %v117 = vpop.permute.xlu0 %116
    %120 = vset.pattern.permute.xlu0 0
    %121 = vperm.xlu0 %120, %v35
    %v122 = vpop.permute.xlu0 %121
    %125 = vset.pattern.permute.xlu0 0
    %126 = vperm.xlu0 %125, %v36
    %v127 = vpop.permute.xlu0 %126
    %130 = vset.pattern.permute.xlu0 0
    %131 = vperm.xlu0 %130, %v37
    %v132 = vpop.permute.xlu0 %131
    %135 = vset.pattern.permute.xlu0 0
    %136 = vperm.xlu0 %135, %v38
    %v137 = vpop.permute.xlu0 %136
    %140 = vset.pattern.permute.xlu0 0
    %141 = vperm.xlu0 %140, %v39
    %v142 = vpop.permute.xlu0 %141
    %145 = vset.pattern.permute.xlu0 0
    %146 = vperm.xlu0 %145, %v40
    %v147 = vpop.permute.xlu0 %146
    %150 = vset.pattern.permute.xlu0 0
    %151 = vperm.xlu0 %150, %v41
    %v152 = vpop.permute.xlu0 %151
    %155 = vset.pattern.permute.xlu0 0
    %156 = vperm.xlu0 %155, %v42
    %v157 = vpop.permute.xlu0 %156
    %v159 = vlaneseq
    %v160 = vshrl.u32 %v159, 7
    %v161 = vsub.s32 0, %v160
    %v162 = vrot.slane %v77, %v161
    %v163 = vmul.f32 %v82, %v162
    %v164 = vmul.f32 %v87, %v162
    %v165 = vmul.f32 %v92, %v162
    %v166 = vmul.f32 %v97, %v162
    %v167 = vmul.f32 %v102, %v162
    %v168 = vmul.f32 %v107, %v162
    %v169 = vmul.f32 %v112, %v162
    %v170 = vmul.f32 %v117, %v162
    %v171 = vmul.f32 %v122, %v162
    %v172 = vmul.f32 %v127, %v162
    %v173 = vmul.f32 %v132, %v162
    %v174 = vmul.f32 %v137, %v162
    %v175 = vmul.f32 %v142, %v162
    %v176 = vmul.f32 %v147, %v162
    %v177 = vmul.f32 %v152, %v162
    %v178 = vmul.f32 %v157, %v162
    %180 = vset.pattern.permute.xlu0 0
    %181 = vperm.xlu0 %180, %v59
    %v182 = vpop.permute.xlu0 %181
    %185 = vset.pattern.permute.xlu0 0
    %186 = vperm.xlu0 %185, %v60
    %v187 = vpop.permute.xlu0 %186
    %190 = vset.pattern.permute.xlu0 0
    %191 = vperm.xlu0 %190, %v61
    %v192 = vpop.permute.xlu0 %191
    %195 = vset.pattern.permute.xlu0 0
    %196 = vperm.xlu0 %195, %v62
    %v197 = vpop.permute.xlu0 %196
    %200 = vset.pattern.permute.xlu0 0
    %201 = vperm.xlu0 %200, %v63
    %v202 = vpop.permute.xlu0 %201
    %205 = vset.pattern.permute.xlu0 0
    %206 = vperm.xlu0 %205, %v64
    %v207 = vpop.permute.xlu0 %206
    %210 = vset.pattern.permute.xlu0 0
    %211 = vperm.xlu0 %210, %v65
    %v212 = vpop.permute.xlu0 %211
    %215 = vset.pattern.permute.xlu0 0
    %216 = vperm.xlu0 %215, %v66
    %v217 = vpop.permute.xlu0 %216
    %220 = vset.pattern.permute.xlu0 0
    %221 = vperm.xlu0 %220, %v67
    %v222 = vpop.permute.xlu0 %221
    %225 = vset.pattern.permute.xlu0 0
    %226 = vperm.xlu0 %225, %v68
    %v227 = vpop.permute.xlu0 %226
    %230 = vset.pattern.permute.xlu0 0
    %231 = vperm.xlu0 %230, %v69
    %v232 = vpop.permute.xlu0 %231
    %235 = vset.pattern.permute.xlu0 0
    %236 = vperm.xlu0 %235, %v70
    %v237 = vpop.permute.xlu0 %236
    %240 = vset.pattern.permute.xlu0 0
    %241 = vperm.xlu0 %240, %v71
    %v242 = vpop.permute.xlu0 %241
    %245 = vset.pattern.permute.xlu0 0
    %246 = vperm.xlu0 %245, %v72
    %v247 = vpop.permute.xlu0 %246
    %250 = vset.pattern.permute.xlu0 0
    %251 = vperm.xlu0 %250, %v73
    %v252 = vpop.permute.xlu0 %251
    %255 = vset.pattern.permute.xlu0 0
    %256 = vperm.xlu0 %255, %v74
    %v257 = vpop.permute.xlu0 %256
    %v259 = vadd.f32 %v163, %v182
    %v260 = vadd.f32 %v164, %v187
    %v261 = vadd.f32 %v165, %v192
    %v262 = vadd.f32 %v166, %v197
    %v263 = vadd.f32 %v167, %v202
    %v264 = vadd.f32 %v168, %v207
    %v265 = vadd.f32 %v169, %v212
    %v266 = vadd.f32 %v170, %v217
    %v267 = vadd.f32 %v171, %v222
    %v268 = vadd.f32 %v172, %v227
    %v269 = vadd.f32 %v173, %v232
    %v270 = vadd.f32 %v174, %v237
    %v271 = vadd.f32 %v175, %v242
    %v272 = vadd.f32 %v176, %v247
    %v273 = vadd.f32 %v177, %v252
    %v274 = vadd.f32 %v178, %v257
    %vm275 = vcmask 261120
    %v277 = vsel %vm275, %v43, 0
    %v280 = vsel %vm275, %v44, 0
    %v283 = vsel %vm275, %v45, 0
    %v286 = vsel %vm275, %v46, 0
    %v289 = vsel %vm275, %v47, 0
    %v292 = vsel %vm275, %v48, 0
    %v295 = vsel %vm275, %v49, 0
    %v298 = vsel %vm275, %v50, 0
    %v301 = vsel %vm275, %v51, 0
    %v304 = vsel %vm275, %v52, 0
    %v307 = vsel %vm275, %v53, 0
    %v310 = vsel %vm275, %v54, 0
    %v313 = vsel %vm275, %v55, 0
    %v316 = vsel %vm275, %v56, 0
    %v319 = vsel %vm275, %v57, 0
    %v322 = vsel %vm275, %v58, 0
    %324 = vmatprep.subr.mxu0 0.0
    %325 = vmatpush1.msra.mxu0 0.0
    %326 = vmatprep.subr.mxu0 0.0
    %327 = vmatpush1.msra.mxu0 0.0
    %328 = vmatprep.subr.mxu0 0.0
    %329 = vmatpush1.msra.mxu0 0.0
    %330 = vmatprep.subr.mxu0 0.0
    %331 = vmatpush1.msra.mxu0 0.0
    %332 = vmatprep.subr.mxu0 0.0
    %333 = vmatpush1.msra.mxu0 0.0
    %334 = vmatprep.subr.mxu0 0.0
    %335 = vmatpush1.msra.mxu0 0.0
    %336 = vmatprep.subr.mxu0 0.0
    %337 = vmatpush1.msra.mxu0 0.0
    %338 = vmatprep.subr.mxu0 0.0
    %339 = vmatpush1.msra.mxu0 0.0
    %340 = vmatprep.subr.mxu0 0.0
    %341 = vmatpush1.msra.mxu0 0.0
    %342 = vmatprep.subr.mxu0 0.0
    %343 = vmatpush1.msra.mxu0 0.0
    %344 = vmatprep.subr.mxu0 0.0
    %345 = vmatpush1.msra.mxu0 0.0
    %346 = vmatprep.subr.mxu0 0.0
    %347 = vmatpush1.msra.mxu0 0.0
    %348 = vmatprep.subr.mxu0 0.0
    %349 = vmatpush1.msra.mxu0 0.0
    %350 = vmatprep.subr.mxu0 0.0
    %351 = vmatpush1.msra.mxu0 0.0
    %352 = vmatprep.subr.mxu0 0.0
    %353 = vmatpush1.msra.mxu0 0.0
    %354 = vmatprep.subr.mxu0 0.0
    %355 = vmatpush1.msra.mxu0 0.0
    %356 = vmatprep.subr.mxu0 0.0
    %357 = vmatpush1.msra.mxu0 0.0
    %358 = vmatprep.subr.mxu0 0.0
    %359 = vmatpush1.msra.mxu0 0.0
    %360 = vmatprep.subr.mxu0 0.0
    %361 = vmatpush1.msra.mxu0 0.0
    %362 = vmatprep.subr.mxu0 0.0
    %363 = vmatpush1.msra.mxu0 0.0
    %364 = vmatprep.subr.mxu0 0.0
    %365 = vmatpush1.msra.mxu0 0.0
    %366 = vmatprep.subr.mxu0 0.0
    %367 = vmatpush1.msra.mxu0 0.0
    %368 = vmatprep.subr.mxu0 0.0
    %369 = vmatpush1.msra.mxu0 0.0
    %370 = vmatprep.subr.mxu0 0.0
    %371 = vmatpush1.msra.mxu0 0.0
    %372 = vmatprep.subr.mxu0 0.0
    %373 = vmatpush1.msra.mxu0 0.0
    %374 = vmatprep.subr.mxu0 0.0
    %375 = vmatpush1.msra.mxu0 0.0
    %376 = vmatprep.subr.mxu0 0.0
    %377 = vmatpush1.msra.mxu0 0.0
    %378 = vmatprep.subr.mxu0 0.0
    %379 = vmatpush1.msra.mxu0 0.0
    %380 = vmatprep.subr.mxu0 0.0
    %381 = vmatpush1.msra.mxu0 0.0
    %382 = vmatprep.subr.mxu0 0.0
    %383 = vmatpush1.msra.mxu0 0.0
    %384 = vmatprep.subr.mxu0 0.0
    %385 = vmatpush1.msra.mxu0 0.0
    %386 = vmatprep.subr.mxu0 0.0
    %387 = vmatpush1.msra.mxu0 0.0
    %388 = vmatprep.mubr.f32.mxu0 0.0
    %389 = vmatmul.mubr.f32.gmra.mrb[0].mxu0 %v277
    %v390 = vpop.f32.mrb[0].mxu0
    %v391 = vadd.f32 0.0, %v390
    %v392 = vpop.f32.mrb[0].mxu0
    %393 = vmatprep.mubr.f32.mxu0 0.0
    %394 = vmatmul.mubr.f32.gmra.mrb[0].mxu0 %v280
    %v395 = vpop.f32.mrb[0].mxu0
    %v396 = vadd.f32 0.0, %v395
    %v397 = vpop.f32.mrb[0].mxu0
    %398 = vmatprep.mubr.f32.mxu0 0.0
    %399 = vmatmul.mubr.f32.gmra.mrb[0].mxu0 %v283
    %v400 = vpop.f32.mrb[0].mxu0
    %v401 = vadd.f32 0.0, %v400
    %v402 = vpop.f32.mrb[0].mxu0
    %403 = vmatprep.mubr.f32.mxu0 0.0
    %404 = vmatmul.mubr.f32.gmra.mrb[0].mxu0 %v286
    %v405 = vpop.f32.mrb[0].mxu0
    %v406 = vadd.f32 0.0, %v405
    %v407 = vpop.f32.mrb[0].mxu0
    %408 = vmatprep.mubr.f32.mxu0 0.0
    %409 = vmatmul.mubr.f32.gmra.mrb[0].mxu0 %v289
    %v410 = vpop.f32.mrb[0].mxu0
    %v411 = vadd.f32 0.0, %v410
    %v412 = vpop.f32.mrb[0].mxu0
    %413 = vmatprep.mubr.f32.mxu0 0.0
    %414 = vmatmul.mubr.f32.gmra.mrb[0].mxu0 %v292
    %v415 = vpop.f32.mrb[0].mxu0
    %v416 = vadd.f32 0.0, %v415
    %v417 = vpop.f32.mrb[0].mxu0
    %418 = vmatprep.mubr.f32.mxu0 0.0
    %419 = vmatmul.mubr.f32.gmra.mrb[0].mxu0 %v295
    %v420 = vpop.f32.mrb[0].mxu0
    %v421 = vadd.f32 0.0, %v420
    %v422 = vpop.f32.mrb[0].mxu0
    %423 = vmatprep.mubr.f32.mxu0 0.0
    %424 = vmatmul.mubr.f32.gmra.mrb[0].mxu0 %v298
    %v425 = vpop.f32.mrb[0].mxu0
    %v426 = vadd.f32 0.0, %v425
    %v427 = vpop.f32.mrb[0].mxu0
    %428 = vmatprep.mubr.f32.mxu0 0.0
    %429 = vmatmul.mubr.f32.gmra.mrb[0].mxu0 %v301
    %v430 = vpop.f32.mrb[0].mxu0
    %v431 = vadd.f32 0.0, %v430
    %v432 = vpop.f32.mrb[0].mxu0
    %433 = vmatprep.mubr.f32.mxu0 0.0
    %434 = vmatmul.mubr.f32.gmra.mrb[0].mxu0 %v304
    %v435 = vpop.f32.mrb[0].mxu0
    %v436 = vadd.f32 0.0, %v435
    %v437 = vpop.f32.mrb[0].mxu0
    %438 = vmatprep.mubr.f32.mxu0 0.0
    %439 = vmatmul.mubr.f32.gmra.mrb[0].mxu0 %v307
    %v440 = vpop.f32.mrb[0].mxu0
    %v441 = vadd.f32 0.0, %v440
    %v442 = vpop.f32.mrb[0].mxu0
    %443 = vmatprep.mubr.f32.mxu0 0.0
    %444 = vmatmul.mubr.f32.gmra.mrb[0].mxu0 %v310
    %v445 = vpop.f32.mrb[0].mxu0
    %v446 = vadd.f32 0.0, %v445
    %v447 = vpop.f32.mrb[0].mxu0
    %448 = vmatprep.mubr.f32.mxu0 0.0
    %449 = vmatmul.mubr.f32.gmra.mrb[0].mxu0 %v313
    %v450 = vpop.f32.mrb[0].mxu0
    %v451 = vadd.f32 0.0, %v450
    %v452 = vpop.f32.mrb[0].mxu0
    %453 = vmatprep.mubr.f32.mxu0 0.0
    %454 = vmatmul.mubr.f32.gmra.mrb[0].mxu0 %v316
    %v455 = vpop.f32.mrb[0].mxu0
    %v456 = vadd.f32 0.0, %v455
    %v457 = vpop.f32.mrb[0].mxu0
    %458 = vmatprep.mubr.f32.mxu0 0.0
    %459 = vmatmul.mubr.f32.gmra.mrb[0].mxu0 %v319
    %v460 = vpop.f32.mrb[0].mxu0
    %v461 = vadd.f32 0.0, %v460
    %v462 = vpop.f32.mrb[0].mxu0
    %463 = vmatprep.mubr.f32.mxu0 0.0
    %464 = vmatmul.mubr.f32.gmra.mrb[0].mxu0 %v322
    %v465 = vpop.f32.mrb[0].mxu0
    %v466 = vadd.f32 0.0, %v465
    %v467 = vpop.f32.mrb[0].mxu0
    %468 = vdwg.mxu0
    %v469 = vadd.f32 %v259, %v391
    %v470 = vadd.f32 %v260, %v396
    %v471 = vadd.f32 %v261, %v401
    %v472 = vadd.f32 %v262, %v406
    %v473 = vadd.f32 %v263, %v411
    %v474 = vadd.f32 %v264, %v416
    %v475 = vadd.f32 %v265, %v421
    %v476 = vadd.f32 %v266, %v426
    %v477 = vadd.f32 %v267, %v431
    %v478 = vadd.f32 %v268, %v436
    %v479 = vadd.f32 %v269, %v441
    %v480 = vadd.f32 %v270, %v446
    %v481 = vadd.f32 %v271, %v451
    %v482 = vadd.f32 %v272, %v456
    %v483 = vadd.f32 %v273, %v461
    %v484 = vadd.f32 %v274, %v466
    %v485 = vtanh.pop %v469
    %v486 = vtanh.pop %v470
    %v487 = vtanh.pop %v471
    %v488 = vtanh.pop %v472
    %v489 = vtanh.pop %v473
    %v490 = vtanh.pop %v474
    %v491 = vtanh.pop %v475
    %v492 = vtanh.pop %v476
    %v493 = vtanh.pop %v477
    %v494 = vtanh.pop %v478
    %v495 = vtanh.pop %v479
    %v496 = vtanh.pop %v480
    %v497 = vtanh.pop %v481
    %v498 = vtanh.pop %v482
    %v499 = vtanh.pop %v483
    %v500 = vtanh.pop %v484
    %v501 = vmul.f32 %v485, 0.5
    %v502 = vmul.f32 %v486, 0.5
    %v503 = vmul.f32 %v487, 0.5
    %v504 = vmul.f32 %v488, 0.5
    %v505 = vadd.f32 %v501, 0.5
    %v506 = vadd.f32 %v502, 0.5
    %v507 = vadd.f32 %v503, 0.5
    %v508 = vadd.f32 %v504, 0.5
    %v509 = vmul.f32 %v489, 0.5
    %v510 = vmul.f32 %v490, 0.5
    %v511 = vmul.f32 %v491, 0.5
    %v512 = vmul.f32 %v492, 0.5
    %v513 = vadd.f32 %v509, 0.5
    %v514 = vadd.f32 %v510, 0.5
    %v515 = vadd.f32 %v511, 0.5
    %v516 = vadd.f32 %v512, 0.5
    %v517 = vmul.f32 %v497, 0.5
    %v518 = vmul.f32 %v498, 0.5
    %v519 = vmul.f32 %v499, 0.5
    %v520 = vmul.f32 %v500, 0.5
    %v521 = vadd.f32 %v517, 0.5
    %v522 = vadd.f32 %v518, 0.5
    %v523 = vadd.f32 %v519, 0.5
    %v524 = vadd.f32 %v520, 0.5
    %v525 = vmul.f32 %v513, 0.0
    %v526 = vmul.f32 %v514, 0.0
    %v527 = vmul.f32 %v515, 0.0
    %v528 = vmul.f32 %v516, 0.0
    %v529 = vmul.f32 %v505, %v493
    %v530 = vmul.f32 %v506, %v494
    %v531 = vmul.f32 %v507, %v495
    %v532 = vmul.f32 %v508, %v496
    %v533 = vadd.f32 %v525, %v529
    %v534 = vadd.f32 %v526, %v530
    %v535 = vadd.f32 %v527, %v531
    %v536 = vadd.f32 %v528, %v532
    %v537 = vtanh.pop %v533
    %v538 = vtanh.pop %v534
    %v539 = vtanh.pop %v535
    %v540 = vtanh.pop %v536
    %v541 = vmul.f32 %v521, %v537
    %v542 = vmul.f32 %v522, %v538
    %v543 = vmul.f32 %v523, %v539
    %v544 = vmul.f32 %v524, %v540
    %vm545 = vcmp.gt.s32.totalorder %v78, 0
    %v546 = vsel %vm545, 1, 0
    %v547 = vlaneseq
    %v548 = vshrl.u32 %v547, 7
    %v549 = vsub.s32 0, %v548
    %v550 = vrot.slane %v546, %v549
    %vm551 = vcmp.eq.s32.totalorder %v550, 1
    %v552 = vsel %vm551, %v541, 0.0
    %v553 = vsel %vm551, %v542, 0.0
    %v554 = vsel %vm551, %v543, 0.0
    %v555 = vsel %vm551, %v544, 0.0
    %v556 = vsel %vm551, %v533, 0.0
    %v557 = vsel %vm551, %v534, 0.0
    %v558 = vsel %vm551, %v535, 0.0
    %v559 = vsel %vm551, %v536, 0.0
    %v560 = vlaneseq
    %v561 = vshrl.u32 %v560, 7
    %v562 = vsub.s32 1, %v561
    %v563 = vrot.slane %v77, %v562
    %v564 = vmul.f32 %v82, %v563
    %v565 = vmul.f32 %v87, %v563
    %v566 = vmul.f32 %v92, %v563
    %v567 = vmul.f32 %v97, %v563
    %v568 = vmul.f32 %v102, %v563
    %v569 = vmul.f32 %v107, %v563
    %v570 = vmul.f32 %v112, %v563
    %v571 = vmul.f32 %v117, %v563
    %v572 = vmul.f32 %v122, %v563
    %v573 = vmul.f32 %v127, %v563
    %v574 = vmul.f32 %v132, %v563
    %v575 = vmul.f32 %v137, %v563
    %v576 = vmul.f32 %v142, %v563
    %v577 = vmul.f32 %v147, %v563
    %v578 = vmul.f32 %v152, %v563
    %v579 = vmul.f32 %v157, %v563
    %v580 = vadd.f32 %v564, %v182
    %v581 = vadd.f32 %v565, %v187
    %v582 = vadd.f32 %v566, %v192
    %v583 = vadd.f32 %v567, %v197
    %v584 = vadd.f32 %v568, %v202
    %v585 = vadd.f32 %v569, %v207
    %v586 = vadd.f32 %v570, %v212
    %v587 = vadd.f32 %v571, %v217
    %v588 = vadd.f32 %v572, %v222
    %v589 = vadd.f32 %v573, %v227
    %v590 = vadd.f32 %v574, %v232
    %v591 = vadd.f32 %v575, %v237
    %v592 = vadd.f32 %v576, %v242
    %v593 = vadd.f32 %v577, %v247
    %v594 = vadd.f32 %v578, %v252
    %v595 = vadd.f32 %v579, %v257
    %596 = vmatprep.subr.mxu0 0.0
    %597 = vmatpush1.msra.mxu0 %v552
    %598 = vmatprep.subr.mxu0 0.0
    %599 = vmatpush1.msra.mxu0 %v553
    %600 = vmatprep.subr.mxu0 0.0
    %601 = vmatpush1.msra.mxu0 %v554
    %602 = vmatprep.subr.mxu0 0.0
    %603 = vmatpush1.msra.mxu0 %v555
    %604 = vmatprep.subr.mxu0 0.0
    %605 = vmatpush1.msra.mxu0 0.0
    %606 = vmatprep.subr.mxu0 0.0
    %607 = vmatpush1.msra.mxu0 0.0
    %608 = vmatprep.subr.mxu0 0.0
    %609 = vmatpush1.msra.mxu0 0.0
    %610 = vmatprep.subr.mxu0 0.0
    %611 = vmatpush1.msra.mxu0 0.0
    %612 = vmatprep.subr.mxu0 0.0
    %613 = vmatpush1.msra.mxu0 0.0
    %614 = vmatprep.subr.mxu0 0.0
    %615 = vmatpush1.msra.mxu0 0.0
    %616 = vmatprep.subr.mxu0 0.0
    %617 = vmatpush1.msra.mxu0 0.0
    %618 = vmatprep.subr.mxu0 0.0
    %619 = vmatpush1.msra.mxu0 0.0
    %620 = vmatprep.subr.mxu0 0.0
    %621 = vmatpush1.msra.mxu0 0.0
    %622 = vmatprep.subr.mxu0 0.0
    %623 = vmatpush1.msra.mxu0 0.0
    %624 = vmatprep.subr.mxu0 0.0
    %625 = vmatpush1.msra.mxu0 0.0
    %626 = vmatprep.subr.mxu0 0.0
    %627 = vmatpush1.msra.mxu0 0.0
    %628 = vmatprep.subr.mxu0 0.0
    %629 = vmatpush1.msra.mxu0 0.0
    %630 = vmatprep.subr.mxu0 0.0
    %631 = vmatpush1.msra.mxu0 0.0
    %632 = vmatprep.subr.mxu0 0.0
    %633 = vmatpush1.msra.mxu0 0.0
    %634 = vmatprep.subr.mxu0 0.0
    %635 = vmatpush1.msra.mxu0 0.0
    %636 = vmatprep.subr.mxu0 0.0
    %637 = vmatpush1.msra.mxu0 0.0
    %638 = vmatprep.subr.mxu0 0.0
    %639 = vmatpush1.msra.mxu0 0.0
    %640 = vmatprep.subr.mxu0 0.0
    %641 = vmatpush1.msra.mxu0 0.0
    %642 = vmatprep.subr.mxu0 0.0
    %643 = vmatpush1.msra.mxu0 0.0
    %644 = vmatprep.subr.mxu0 0.0
    %645 = vmatpush1.msra.mxu0 0.0
    %646 = vmatprep.subr.mxu0 0.0
    %647 = vmatpush1.msra.mxu0 0.0
    %648 = vmatprep.subr.mxu0 0.0
    %649 = vmatpush1.msra.mxu0 0.0
    %650 = vmatprep.subr.mxu0 0.0
    %651 = vmatpush1.msra.mxu0 0.0
    %652 = vmatprep.subr.mxu0 0.0
    %653 = vmatpush1.msra.mxu0 0.0
    %654 = vmatprep.subr.mxu0 0.0
    %655 = vmatpush1.msra.mxu0 0.0
    %656 = vmatprep.subr.mxu0 0.0
    %657 = vmatpush1.msra.mxu0 0.0
    %658 = vmatprep.subr.mxu0 0.0
    %659 = vmatpush1.msra.mxu0 0.0
    %660 = vmatprep.mubr.f32.mxu0 0.0
    %661 = vmatmul.mubr.f32.gmra.mrb[0].mxu0 %v277
    %v662 = vpop.f32.mrb[0].mxu0
    %v663 = vadd.f32 0.0, %v662
    %v664 = vpop.f32.mrb[0].mxu0
    %665 = vmatprep.mubr.f32.mxu0 0.0
    %666 = vmatmul.mubr.f32.gmra.mrb[0].mxu0 %v280
    %v667 = vpop.f32.mrb[0].mxu0
    %v668 = vadd.f32 0.0, %v667
    %v669 = vpop.f32.mrb[0].mxu0
    %670 = vmatprep.mubr.f32.mxu0 0.0
    %671 = vmatmul.mubr.f32.gmra.mrb[0].mxu0 %v283
    %v672 = vpop.f32.mrb[0].mxu0
    %v673 = vadd.f32 0.0, %v672
    %v674 = vpop.f32.mrb[0].mxu0
    %675 = vmatprep.mubr.f32.mxu0 0.0
    %676 = vmatmul.mubr.f32.gmra.mrb[0].mxu0 %v286
    %v677 = vpop.f32.mrb[0].mxu0
    %v678 = vadd.f32 0.0, %v677
    %v679 = vpop.f32.mrb[0].mxu0
    %680 = vmatprep.mubr.f32.mxu0 0.0
    %681 = vmatmul.mubr.f32.gmra.mrb[0].mxu0 %v289
    %v682 = vpop.f32.mrb[0].mxu0
    %v683 = vadd.f32 0.0, %v682
    %v684 = vpop.f32.mrb[0].mxu0
    %685 = vmatprep.mubr.f32.mxu0 0.0
    %686 = vmatmul.mubr.f32.gmra.mrb[0].mxu0 %v292
    %v687 = vpop.f32.mrb[0].mxu0
    %v688 = vadd.f32 0.0, %v687
    %v689 = vpop.f32.mrb[0].mxu0
    %690 = vmatprep.mubr.f32.mxu0 0.0
    %691 = vmatmul.mubr.f32.gmra.mrb[0].mxu0 %v295
    %v692 = vpop.f32.mrb[0].mxu0
    %v693 = vadd.f32 0.0, %v692
    %v694 = vpop.f32.mrb[0].mxu0
    %695 = vmatprep.mubr.f32.mxu0 0.0
    %696 = vmatmul.mubr.f32.gmra.mrb[0].mxu0 %v298
    %v697 = vpop.f32.mrb[0].mxu0
    %v698 = vadd.f32 0.0, %v697
    %v699 = vpop.f32.mrb[0].mxu0
    %700 = vmatprep.mubr.f32.mxu0 0.0
    %701 = vmatmul.mubr.f32.gmra.mrb[0].mxu0 %v301
    %v702 = vpop.f32.mrb[0].mxu0
    %v703 = vadd.f32 0.0, %v702
    %v704 = vpop.f32.mrb[0].mxu0
    %705 = vmatprep.mubr.f32.mxu0 0.0
    %706 = vmatmul.mubr.f32.gmra.mrb[0].mxu0 %v304
    %v707 = vpop.f32.mrb[0].mxu0
    %v708 = vadd.f32 0.0, %v707
    %v709 = vpop.f32.mrb[0].mxu0
    %710 = vmatprep.mubr.f32.mxu0 0.0
    %711 = vmatmul.mubr.f32.gmra.mrb[0].mxu0 %v307
    %v712 = vpop.f32.mrb[0].mxu0
    %v713 = vadd.f32 0.0, %v712
    %v714 = vpop.f32.mrb[0].mxu0
    %715 = vmatprep.mubr.f32.mxu0 0.0
    %716 = vmatmul.mubr.f32.gmra.mrb[0].mxu0 %v310
    %v717 = vpop.f32.mrb[0].mxu0
    %v718 = vadd.f32 0.0, %v717
    %v719 = vpop.f32.mrb[0].mxu0
    %720 = vmatprep.mubr.f32.mxu0 0.0
    %721 = vmatmul.mubr.f32.gmra.mrb[0].mxu0 %v313
    %v722 = vpop.f32.mrb[0].mxu0
    %v723 = vadd.f32 0.0, %v722
    %v724 = vpop.f32.mrb[0].mxu0
    %725 = vmatprep.mubr.f32.mxu0 0.0
    %726 = vmatmul.mubr.f32.gmra.mrb[0].mxu0 %v316
    %v727 = vpop.f32.mrb[0].mxu0
    %v728 = vadd.f32 0.0, %v727
    %v729 = vpop.f32.mrb[0].mxu0
    %730 = vmatprep.mubr.f32.mxu0 0.0
    %731 = vmatmul.mubr.f32.gmra.mrb[0].mxu0 %v319
    %v732 = vpop.f32.mrb[0].mxu0
    %v733 = vadd.f32 0.0, %v732
    %v734 = vpop.f32.mrb[0].mxu0
    %735 = vmatprep.mubr.f32.mxu0 0.0
    %736 = vmatmul.mubr.f32.gmra.mrb[0].mxu0 %v322
    %v737 = vpop.f32.mrb[0].mxu0
    %v738 = vadd.f32 0.0, %v737
    %v739 = vpop.f32.mrb[0].mxu0
    %740 = vdwg.mxu0
    %v741 = vadd.f32 %v580, %v663
    %v742 = vadd.f32 %v581, %v668
    %v743 = vadd.f32 %v582, %v673
    %v744 = vadd.f32 %v583, %v678
    %v745 = vadd.f32 %v584, %v683
    %v746 = vadd.f32 %v585, %v688
    %v747 = vadd.f32 %v586, %v693
    %v748 = vadd.f32 %v587, %v698
    %v749 = vadd.f32 %v588, %v703
    %v750 = vadd.f32 %v589, %v708
    %v751 = vadd.f32 %v590, %v713
    %v752 = vadd.f32 %v591, %v718
    %v753 = vadd.f32 %v592, %v723
    %v754 = vadd.f32 %v593, %v728
    %v755 = vadd.f32 %v594, %v733
    %v756 = vadd.f32 %v595, %v738
    %v757 = vtanh.pop %v741
    %v758 = vtanh.pop %v742
    %v759 = vtanh.pop %v743
    %v760 = vtanh.pop %v744
    %v761 = vtanh.pop %v745
    %v762 = vtanh.pop %v746
    %v763 = vtanh.pop %v747
    %v764 = vtanh.pop %v748
    %v765 = vtanh.pop %v749
    %v766 = vtanh.pop %v750
    %v767 = vtanh.pop %v751
    %v768 = vtanh.pop %v752
    %v769 = vtanh.pop %v753
    %v770 = vtanh.pop %v754
    %v771 = vtanh.pop %v755
    %v772 = vtanh.pop %v756
    %v773 = vmul.f32 %v757, 0.5
    %v774 = vmul.f32 %v758, 0.5
    %v775 = vmul.f32 %v759, 0.5
    %v776 = vmul.f32 %v760, 0.5
    %v777 = vadd.f32 %v773, 0.5
    %v778 = vadd.f32 %v774, 0.5
    %v779 = vadd.f32 %v775, 0.5
    %v780 = vadd.f32 %v776, 0.5
    %v781 = vmul.f32 %v761, 0.5
    %v782 = vmul.f32 %v762, 0.5
    %v783 = vmul.f32 %v763, 0.5
    %v784 = vmul.f32 %v764, 0.5
    %v785 = vadd.f32 %v781, 0.5
    %v786 = vadd.f32 %v782, 0.5
    %v787 = vadd.f32 %v783, 0.5
    %v788 = vadd.f32 %v784, 0.5
    %v789 = vmul.f32 %v769, 0.5
    %v790 = vmul.f32 %v770, 0.5
    %v791 = vmul.f32 %v771, 0.5
    %v792 = vmul.f32 %v772, 0.5
    %v793 = vadd.f32 %v789, 0.5
    %v794 = vadd.f32 %v790, 0.5
    %v795 = vadd.f32 %v791, 0.5
    %v796 = vadd.f32 %v792, 0.5
    %v797 = vmul.f32 %v785, %v556
    %v798 = vmul.f32 %v786, %v557
    %v799 = vmul.f32 %v787, %v558
    %v800 = vmul.f32 %v788, %v559
    %v801 = vmul.f32 %v777, %v765
    %v802 = vmul.f32 %v778, %v766
    %v803 = vmul.f32 %v779, %v767
    %v804 = vmul.f32 %v780, %v768
    %v805 = vadd.f32 %v797, %v801
    %v806 = vadd.f32 %v798, %v802
    %v807 = vadd.f32 %v799, %v803
    %v808 = vadd.f32 %v800, %v804
    %v809 = vtanh.pop %v805
    %v810 = vtanh.pop %v806
    %v811 = vtanh.pop %v807
    %v812 = vtanh.pop %v808
    %v813 = vmul.f32 %v793, %v809
    %v814 = vmul.f32 %v794, %v810
    %v815 = vmul.f32 %v795, %v811
    %v816 = vmul.f32 %v796, %v812
    %vm817 = vcmp.gt.s32.totalorder %v78, 1
    %v818 = vsel %vm817, 1, 0
    %v819 = vlaneseq
    %v820 = vshrl.u32 %v819, 7
    %v821 = vsub.s32 0, %v820
    %v822 = vrot.slane %v818, %v821
    %vm823 = vcmp.eq.s32.totalorder %v822, 1
    %v824 = vsel %vm823, %v813, %v552
    %v825 = vsel %vm823, %v814, %v553
    %v826 = vsel %vm823, %v815, %v554
    %v827 = vsel %vm823, %v816, %v555
    %v828 = vsel %vm823, %v805, %v556
    %v829 = vsel %vm823, %v806, %v557
    %v830 = vsel %vm823, %v807, %v558
    %v831 = vsel %vm823, %v808, %v559
    %v832 = vlaneseq
    %v833 = vshrl.u32 %v832, 7
    %v834 = vsub.s32 2, %v833
    %v835 = vrot.slane %v77, %v834
    %v836 = vmul.f32 %v82, %v835
    %v837 = vmul.f32 %v87, %v835
    %v838 = vmul.f32 %v92, %v835
    %v839 = vmul.f32 %v97, %v835
    %v840 = vmul.f32 %v102, %v835
    %v841 = vmul.f32 %v107, %v835
    %v842 = vmul.f32 %v112, %v835
    %v843 = vmul.f32 %v117, %v835
    %v844 = vmul.f32 %v122, %v835
    %v845 = vmul.f32 %v127, %v835
    %v846 = vmul.f32 %v132, %v835
    %v847 = vmul.f32 %v137, %v835
    %v848 = vmul.f32 %v142, %v835
    %v849 = vmul.f32 %v147, %v835
    %v850 = vmul.f32 %v152, %v835
    %v851 = vmul.f32 %v157, %v835
    %v852 = vadd.f32 %v836, %v182
    %v853 = vadd.f32 %v837, %v187
    %v854 = vadd.f32 %v838, %v192
    %v855 = vadd.f32 %v839, %v197
    %v856 = vadd.f32 %v840, %v202
    %v857 = vadd.f32 %v841, %v207
    %v858 = vadd.f32 %v842, %v212
    %v859 = vadd.f32 %v843, %v217
    %v860 = vadd.f32 %v844, %v222
    %v861 = vadd.f32 %v845, %v227
    %v862 = vadd.f32 %v846, %v232
    %v863 = vadd.f32 %v847, %v237
    %v864 = vadd.f32 %v848, %v242
    %v865 = vadd.f32 %v849, %v247
    %v866 = vadd.f32 %v850, %v252
    %v867 = vadd.f32 %v851, %v257
    %868 = vmatprep.subr.mxu0 0.0
    %869 = vmatpush1.msra.mxu0 %v824
    %870 = vmatprep.subr.mxu0 0.0
    %871 = vmatpush1.msra.mxu0 %v825
    %872 = vmatprep.subr.mxu0 0.0
    %873 = vmatpush1.msra.mxu0 %v826
    %874 = vmatprep.subr.mxu0 0.0
    %875 = vmatpush1.msra.mxu0 %v827
    %876 = vmatprep.subr.mxu0 0.0
    %877 = vmatpush1.msra.mxu0 0.0
    %878 = vmatprep.subr.mxu0 0.0
    %879 = vmatpush1.msra.mxu0 0.0
    %880 = vmatprep.subr.mxu0 0.0
    %881 = vmatpush1.msra.mxu0 0.0
    %882 = vmatprep.subr.mxu0 0.0
    %883 = vmatpush1.msra.mxu0 0.0
    %884 = vmatprep.subr.mxu0 0.0
    %885 = vmatpush1.msra.mxu0 0.0
    %886 = vmatprep.subr.mxu0 0.0
    %887 = vmatpush1.msra.mxu0 0.0
    %888 = vmatprep.subr.mxu0 0.0
    %889 = vmatpush1.msra.mxu0 0.0
    %890 = vmatprep.subr.mxu0 0.0
    %891 = vmatpush1.msra.mxu0 0.0
    %892 = vmatprep.subr.mxu0 0.0
    %893 = vmatpush1.msra.mxu0 0.0
    %894 = vmatprep.subr.mxu0 0.0
    %895 = vmatpush1.msra.mxu0 0.0
    %896 = vmatprep.subr.mxu0 0.0
    %897 = vmatpush1.msra.mxu0 0.0
    %898 = vmatprep.subr.mxu0 0.0
    %899 = vmatpush1.msra.mxu0 0.0
    %900 = vmatprep.subr.mxu0 0.0
    %901 = vmatpush1.msra.mxu0 0.0
    %902 = vmatprep.subr.mxu0 0.0
    %903 = vmatpush1.msra.mxu0 0.0
    %904 = vmatprep.subr.mxu0 0.0
    %905 = vmatpush1.msra.mxu0 0.0
    %906 = vmatprep.subr.mxu0 0.0
    %907 = vmatpush1.msra.mxu0 0.0
    %908 = vmatprep.subr.mxu0 0.0
    %909 = vmatpush1.msra.mxu0 0.0
    %910 = vmatprep.subr.mxu0 0.0
    %911 = vmatpush1.msra.mxu0 0.0
    %912 = vmatprep.subr.mxu0 0.0
    %913 = vmatpush1.msra.mxu0 0.0
    %914 = vmatprep.subr.mxu0 0.0
    %915 = vmatpush1.msra.mxu0 0.0
    %916 = vmatprep.subr.mxu0 0.0
    %917 = vmatpush1.msra.mxu0 0.0
    %918 = vmatprep.subr.mxu0 0.0
    %919 = vmatpush1.msra.mxu0 0.0
    %920 = vmatprep.subr.mxu0 0.0
    %921 = vmatpush1.msra.mxu0 0.0
    %922 = vmatprep.subr.mxu0 0.0
    %923 = vmatpush1.msra.mxu0 0.0
    %924 = vmatprep.subr.mxu0 0.0
    %925 = vmatpush1.msra.mxu0 0.0
    %926 = vmatprep.subr.mxu0 0.0
    %927 = vmatpush1.msra.mxu0 0.0
    %928 = vmatprep.subr.mxu0 0.0
    %929 = vmatpush1.msra.mxu0 0.0
    %930 = vmatprep.subr.mxu0 0.0
    %931 = vmatpush1.msra.mxu0 0.0
    %932 = vmatprep.mubr.f32.mxu0 0.0
    %933 = vmatmul.mubr.f32.gmra.mrb[0].mxu0 %v277
    %v934 = vpop.f32.mrb[0].mxu0
    %v935 = vadd.f32 0.0, %v934
    %v936 = vpop.f32.mrb[0].mxu0
    %937 = vmatprep.mubr.f32.mxu0 0.0
    %938 = vmatmul.mubr.f32.gmra.mrb[0].mxu0 %v280
    %v939 = vpop.f32.mrb[0].mxu0
    %v940 = vadd.f32 0.0, %v939
    %v941 = vpop.f32.mrb[0].mxu0
    %942 = vmatprep.mubr.f32.mxu0 0.0
    %943 = vmatmul.mubr.f32.gmra.mrb[0].mxu0 %v283
    %v944 = vpop.f32.mrb[0].mxu0
    %v945 = vadd.f32 0.0, %v944
    %v946 = vpop.f32.mrb[0].mxu0
    %947 = vmatprep.mubr.f32.mxu0 0.0
    %948 = vmatmul.mubr.f32.gmra.mrb[0].mxu0 %v286
    %v949 = vpop.f32.mrb[0].mxu0
    %v950 = vadd.f32 0.0, %v949
    %v951 = vpop.f32.mrb[0].mxu0
    %952 = vmatprep.mubr.f32.mxu0 0.0
    %953 = vmatmul.mubr.f32.gmra.mrb[0].mxu0 %v289
    %v954 = vpop.f32.mrb[0].mxu0
    %v955 = vadd.f32 0.0, %v954
    %v956 = vpop.f32.mrb[0].mxu0
    %957 = vmatprep.mubr.f32.mxu0 0.0
    %958 = vmatmul.mubr.f32.gmra.mrb[0].mxu0 %v292
    %v959 = vpop.f32.mrb[0].mxu0
    %v960 = vadd.f32 0.0, %v959
    %v961 = vpop.f32.mrb[0].mxu0
    %962 = vmatprep.mubr.f32.mxu0 0.0
    %963 = vmatmul.mubr.f32.gmra.mrb[0].mxu0 %v295
    %v964 = vpop.f32.mrb[0].mxu0
    %v965 = vadd.f32 0.0, %v964
    %v966 = vpop.f32.mrb[0].mxu0
    %967 = vmatprep.mubr.f32.mxu0 0.0
    %968 = vmatmul.mubr.f32.gmra.mrb[0].mxu0 %v298
    %v969 = vpop.f32.mrb[0].mxu0
    %v970 = vadd.f32 0.0, %v969
    %v971 = vpop.f32.mrb[0].mxu0
    %972 = vmatprep.mubr.f32.mxu0 0.0
    %973 = vmatmul.mubr.f32.gmra.mrb[0].mxu0 %v301
    %v974 = vpop.f32.mrb[0].mxu0
    %v975 = vadd.f32 0.0, %v974
    %v976 = vpop.f32.mrb[0].mxu0
    %977 = vmatprep.mubr.f32.mxu0 0.0
    %978 = vmatmul.mubr.f32.gmra.mrb[0].mxu0 %v304
    %v979 = vpop.f32.mrb[0].mxu0
    %v980 = vadd.f32 0.0, %v979
    %v981 = vpop.f32.mrb[0].mxu0
    %982 = vmatprep.mubr.f32.mxu0 0.0
    %983 = vmatmul.mubr.f32.gmra.mrb[0].mxu0 %v307
    %v984 = vpop.f32.mrb[0].mxu0
    %v985 = vadd.f32 0.0, %v984
    %v986 = vpop.f32.mrb[0].mxu0
    %987 = vmatprep.mubr.f32.mxu0 0.0
    %988 = vmatmul.mubr.f32.gmra.mrb[0].mxu0 %v310
    %v989 = vpop.f32.mrb[0].mxu0
    %v990 = vadd.f32 0.0, %v989
    %v991 = vpop.f32.mrb[0].mxu0
    %992 = vmatprep.mubr.f32.mxu0 0.0
    %993 = vmatmul.mubr.f32.gmra.mrb[0].mxu0 %v313
    %v994 = vpop.f32.mrb[0].mxu0
    %v995 = vadd.f32 0.0, %v994
    %v996 = vpop.f32.mrb[0].mxu0
    %997 = vmatprep.mubr.f32.mxu0 0.0
    %998 = vmatmul.mubr.f32.gmra.mrb[0].mxu0 %v316
    %v999 = vpop.f32.mrb[0].mxu0
    %v1000 = vadd.f32 0.0, %v999
    %v1001 = vpop.f32.mrb[0].mxu0
    %1002 = vmatprep.mubr.f32.mxu0 0.0
    %1003 = vmatmul.mubr.f32.gmra.mrb[0].mxu0 %v319
    %v1004 = vpop.f32.mrb[0].mxu0
    %v1005 = vadd.f32 0.0, %v1004
    %v1006 = vpop.f32.mrb[0].mxu0
    %1007 = vmatprep.mubr.f32.mxu0 0.0
    %1008 = vmatmul.mubr.f32.gmra.mrb[0].mxu0 %v322
    %v1009 = vpop.f32.mrb[0].mxu0
    %v1010 = vadd.f32 0.0, %v1009
    %v1011 = vpop.f32.mrb[0].mxu0
    %1012 = vdwg.mxu0
    %v1013 = vadd.f32 %v852, %v935
    %v1014 = vadd.f32 %v853, %v940
    %v1015 = vadd.f32 %v854, %v945
    %v1016 = vadd.f32 %v855, %v950
    %v1017 = vadd.f32 %v856, %v955
    %v1018 = vadd.f32 %v857, %v960
    %v1019 = vadd.f32 %v858, %v965
    %v1020 = vadd.f32 %v859, %v970
    %v1021 = vadd.f32 %v860, %v975
    %v1022 = vadd.f32 %v861, %v980
    %v1023 = vadd.f32 %v862, %v985
    %v1024 = vadd.f32 %v863, %v990
    %v1025 = vadd.f32 %v864, %v995
    %v1026 = vadd.f32 %v865, %v1000
    %v1027 = vadd.f32 %v866, %v1005
    %v1028 = vadd.f32 %v867, %v1010
    %v1029 = vtanh.pop %v1013
    %v1030 = vtanh.pop %v1014
    %v1031 = vtanh.pop %v1015
    %v1032 = vtanh.pop %v1016
    %v1033 = vtanh.pop %v1017
    %v1034 = vtanh.pop %v1018
    %v1035 = vtanh.pop %v1019
    %v1036 = vtanh.pop %v1020
    %v1037 = vtanh.pop %v1021
    %v1038 = vtanh.pop %v1022
    %v1039 = vtanh.pop %v1023
    %v1040 = vtanh.pop %v1024
    %v1041 = vtanh.pop %v1025
    %v1042 = vtanh.pop %v1026
    %v1043 = vtanh.pop %v1027
    %v1044 = vtanh.pop %v1028
    %v1045 = vmul.f32 %v1029, 0.5
    %v1046 = vmul.f32 %v1030, 0.5
    %v1047 = vmul.f32 %v1031, 0.5
    %v1048 = vmul.f32 %v1032, 0.5
    %v1049 = vadd.f32 %v1045, 0.5
    %v1050 = vadd.f32 %v1046, 0.5
    %v1051 = vadd.f32 %v1047, 0.5
    %v1052 = vadd.f32 %v1048, 0.5
    %v1053 = vmul.f32 %v1033, 0.5
    %v1054 = vmul.f32 %v1034, 0.5
    %v1055 = vmul.f32 %v1035, 0.5
    %v1056 = vmul.f32 %v1036, 0.5
    %v1057 = vadd.f32 %v1053, 0.5
    %v1058 = vadd.f32 %v1054, 0.5
    %v1059 = vadd.f32 %v1055, 0.5
    %v1060 = vadd.f32 %v1056, 0.5
    %v1061 = vmul.f32 %v1041, 0.5
    %v1062 = vmul.f32 %v1042, 0.5
    %v1063 = vmul.f32 %v1043, 0.5
    %v1064 = vmul.f32 %v1044, 0.5
    %v1065 = vadd.f32 %v1061, 0.5
    %v1066 = vadd.f32 %v1062, 0.5
    %v1067 = vadd.f32 %v1063, 0.5
    %v1068 = vadd.f32 %v1064, 0.5
    %v1069 = vmul.f32 %v1057, %v828
    %v1070 = vmul.f32 %v1058, %v829
    %v1071 = vmul.f32 %v1059, %v830
    %v1072 = vmul.f32 %v1060, %v831
    %v1073 = vmul.f32 %v1049, %v1037
    %v1074 = vmul.f32 %v1050, %v1038
    %v1075 = vmul.f32 %v1051, %v1039
    %v1076 = vmul.f32 %v1052, %v1040
    %v1077 = vadd.f32 %v1069, %v1073
    %v1078 = vadd.f32 %v1070, %v1074
    %v1079 = vadd.f32 %v1071, %v1075
    %v1080 = vadd.f32 %v1072, %v1076
    %v1081 = vtanh.pop %v1077
    %v1082 = vtanh.pop %v1078
    %v1083 = vtanh.pop %v1079
    %v1084 = vtanh.pop %v1080
    %v1085 = vmul.f32 %v1065, %v1081
    %v1086 = vmul.f32 %v1066, %v1082
    %v1087 = vmul.f32 %v1067, %v1083
    %v1088 = vmul.f32 %v1068, %v1084
    %vm1089 = vcmp.gt.s32.totalorder %v78, 2
    %v1090 = vsel %vm1089, 1, 0
    %v1091 = vlaneseq
    %v1092 = vshrl.u32 %v1091, 7
    %v1093 = vsub.s32 0, %v1092
    %v1094 = vrot.slane %v1090, %v1093
    %vm1095 = vcmp.eq.s32.totalorder %v1094, 1
    %v1096 = vsel %vm1095, %v1085, %v824
    %v1097 = vsel %vm1095, %v1086, %v825
    %v1098 = vsel %vm1095, %v1087, %v826
    %v1099 = vsel %vm1095, %v1088, %v827
    %v1100 = vsel %vm1095, %v1077, %v828
    %v1101 = vsel %vm1095, %v1078, %v829
    %v1102 = vsel %vm1095, %v1079, %v830
    %v1103 = vsel %vm1095, %v1080, %v831
    %v1104 = vlaneseq
    %v1105 = vshrl.u32 %v1104, 7
    %v1106 = vsub.s32 3, %v1105
    %v1107 = vrot.slane %v77, %v1106
    %v1108 = vmul.f32 %v82, %v1107
    %v1109 = vmul.f32 %v87, %v1107
    %v1110 = vmul.f32 %v92, %v1107
    %v1111 = vmul.f32 %v97, %v1107
    %v1112 = vmul.f32 %v102, %v1107
    %v1113 = vmul.f32 %v107, %v1107
    %v1114 = vmul.f32 %v112, %v1107
    %v1115 = vmul.f32 %v117, %v1107
    %v1116 = vmul.f32 %v122, %v1107
    %v1117 = vmul.f32 %v127, %v1107
    %v1118 = vmul.f32 %v132, %v1107
    %v1119 = vmul.f32 %v137, %v1107
    %v1120 = vmul.f32 %v142, %v1107
    %v1121 = vmul.f32 %v147, %v1107
    %v1122 = vmul.f32 %v152, %v1107
    %v1123 = vmul.f32 %v157, %v1107
    %v1124 = vadd.f32 %v1108, %v182
    %v1125 = vadd.f32 %v1109, %v187
    %v1126 = vadd.f32 %v1110, %v192
    %v1127 = vadd.f32 %v1111, %v197
    %v1128 = vadd.f32 %v1112, %v202
    %v1129 = vadd.f32 %v1113, %v207
    %v1130 = vadd.f32 %v1114, %v212
    %v1131 = vadd.f32 %v1115, %v217
    %v1132 = vadd.f32 %v1116, %v222
    %v1133 = vadd.f32 %v1117, %v227
    %v1134 = vadd.f32 %v1118, %v232
    %v1135 = vadd.f32 %v1119, %v237
    %v1136 = vadd.f32 %v1120, %v242
    %v1137 = vadd.f32 %v1121, %v247
    %v1138 = vadd.f32 %v1122, %v252
    %v1139 = vadd.f32 %v1123, %v257
    %1140 = vmatprep.subr.mxu0 0.0
    %1141 = vmatpush1.msra.mxu0 %v1096
    %1142 = vmatprep.subr.mxu0 0.0
    %1143 = vmatpush1.msra.mxu0 %v1097
    %1144 = vmatprep.subr.mxu0 0.0
    %1145 = vmatpush1.msra.mxu0 %v1098
    %1146 = vmatprep.subr.mxu0 0.0
    %1147 = vmatpush1.msra.mxu0 %v1099
    %1148 = vmatprep.subr.mxu0 0.0
    %1149 = vmatpush1.msra.mxu0 0.0
    %1150 = vmatprep.subr.mxu0 0.0
    %1151 = vmatpush1.msra.mxu0 0.0
    %1152 = vmatprep.subr.mxu0 0.0
    %1153 = vmatpush1.msra.mxu0 0.0
    %1154 = vmatprep.subr.mxu0 0.0
    %1155 = vmatpush1.msra.mxu0 0.0
    %1156 = vmatprep.subr.mxu0 0.0
    %1157 = vmatpush1.msra.mxu0 0.0
    %1158 = vmatprep.subr.mxu0 0.0
    %1159 = vmatpush1.msra.mxu0 0.0
    %1160 = vmatprep.subr.mxu0 0.0
    %1161 = vmatpush1.msra.mxu0 0.0
    %1162 = vmatprep.subr.mxu0 0.0
    %1163 = vmatpush1.msra.mxu0 0.0
    %1164 = vmatprep.subr.mxu0 0.0
    %1165 = vmatpush1.msra.mxu0 0.0
    %1166 = vmatprep.subr.mxu0 0.0
    %1167 = vmatpush1.msra.mxu0 0.0
    %1168 = vmatprep.subr.mxu0 0.0
    %1169 = vmatpush1.msra.mxu0 0.0
    %1170 = vmatprep.subr.mxu0 0.0
    %1171 = vmatpush1.msra.mxu0 0.0
    %1172 = vmatprep.subr.mxu0 0.0
    %1173 = vmatpush1.msra.mxu0 0.0
    %1174 = vmatprep.subr.mxu0 0.0
    %1175 = vmatpush1.msra.mxu0 0.0
    %1176 = vmatprep.subr.mxu0 0.0
    %1177 = vmatpush1.msra.mxu0 0.0
    %1178 = vmatprep.subr.mxu0 0.0
    %1179 = vmatpush1.msra.mxu0 0.0
    %1180 = vmatprep.subr.mxu0 0.0
    %1181 = vmatpush1.msra.mxu0 0.0
    %1182 = vmatprep.subr.mxu0 0.0
    %1183 = vmatpush1.msra.mxu0 0.0
    %1184 = vmatprep.subr.mxu0 0.0
    %1185 = vmatpush1.msra.mxu0 0.0
    %1186 = vmatprep.subr.mxu0 0.0
    %1187 = vmatpush1.msra.mxu0 0.0
    %1188 = vmatprep.subr.mxu0 0.0
    %1189 = vmatpush1.msra.mxu0 0.0
    %1190 = vmatprep.subr.mxu0 0.0
    %1191 = vmatpush1.msra.mxu0 0.0
    %1192 = vmatprep.subr.mxu0 0.0
    %1193 = vmatpush1.msra.mxu0 0.0
    %1194 = vmatprep.subr.mxu0 0.0
    %1195 = vmatpush1.msra.mxu0 0.0
    %1196 = vmatprep.subr.mxu0 0.0
    %1197 = vmatpush1.msra.mxu0 0.0
    %1198 = vmatprep.subr.mxu0 0.0
    %1199 = vmatpush1.msra.mxu0 0.0
    %1200 = vmatprep.subr.mxu0 0.0
    %1201 = vmatpush1.msra.mxu0 0.0
    %1202 = vmatprep.subr.mxu0 0.0
    %1203 = vmatpush1.msra.mxu0 0.0
    %1204 = vmatprep.mubr.f32.mxu0 0.0
    %1205 = vmatmul.mubr.f32.gmra.mrb[0].mxu0 %v277
    %v1206 = vpop.f32.mrb[0].mxu0
    %v1207 = vadd.f32 0.0, %v1206
    %v1208 = vpop.f32.mrb[0].mxu0
    %1209 = vmatprep.mubr.f32.mxu0 0.0
    %1210 = vmatmul.mubr.f32.gmra.mrb[0].mxu0 %v280
    %v1211 = vpop.f32.mrb[0].mxu0
    %v1212 = vadd.f32 0.0, %v1211
    %v1213 = vpop.f32.mrb[0].mxu0
    %1214 = vmatprep.mubr.f32.mxu0 0.0
    %1215 = vmatmul.mubr.f32.gmra.mrb[0].mxu0 %v283
    %v1216 = vpop.f32.mrb[0].mxu0
    %v1217 = vadd.f32 0.0, %v1216
    %v1218 = vpop.f32.mrb[0].mxu0
    %1219 = vmatprep.mubr.f32.mxu0 0.0
    %1220 = vmatmul.mubr.f32.gmra.mrb[0].mxu0 %v286
    %v1221 = vpop.f32.mrb[0].mxu0
    %v1222 = vadd.f32 0.0, %v1221
    %v1223 = vpop.f32.mrb[0].mxu0
    %1224 = vmatprep.mubr.f32.mxu0 0.0
    %1225 = vmatmul.mubr.f32.gmra.mrb[0].mxu0 %v289
    %v1226 = vpop.f32.mrb[0].mxu0
    %v1227 = vadd.f32 0.0, %v1226
    %v1228 = vpop.f32.mrb[0].mxu0
    %1229 = vmatprep.mubr.f32.mxu0 0.0
    %1230 = vmatmul.mubr.f32.gmra.mrb[0].mxu0 %v292
    %v1231 = vpop.f32.mrb[0].mxu0
    %v1232 = vadd.f32 0.0, %v1231
    %v1233 = vpop.f32.mrb[0].mxu0
    %1234 = vmatprep.mubr.f32.mxu0 0.0
    %1235 = vmatmul.mubr.f32.gmra.mrb[0].mxu0 %v295
    %v1236 = vpop.f32.mrb[0].mxu0
    %v1237 = vadd.f32 0.0, %v1236
    %v1238 = vpop.f32.mrb[0].mxu0
    %1239 = vmatprep.mubr.f32.mxu0 0.0
    %1240 = vmatmul.mubr.f32.gmra.mrb[0].mxu0 %v298
    %v1241 = vpop.f32.mrb[0].mxu0
    %v1242 = vadd.f32 0.0, %v1241
    %v1243 = vpop.f32.mrb[0].mxu0
    %1244 = vmatprep.mubr.f32.mxu0 0.0
    %1245 = vmatmul.mubr.f32.gmra.mrb[0].mxu0 %v301
    %v1246 = vpop.f32.mrb[0].mxu0
    %v1247 = vadd.f32 0.0, %v1246
    %v1248 = vpop.f32.mrb[0].mxu0
    %1249 = vmatprep.mubr.f32.mxu0 0.0
    %1250 = vmatmul.mubr.f32.gmra.mrb[0].mxu0 %v304
    %v1251 = vpop.f32.mrb[0].mxu0
    %v1252 = vadd.f32 0.0, %v1251
    %v1253 = vpop.f32.mrb[0].mxu0
    %1254 = vmatprep.mubr.f32.mxu0 0.0
    %1255 = vmatmul.mubr.f32.gmra.mrb[0].mxu0 %v307
    %v1256 = vpop.f32.mrb[0].mxu0
    %v1257 = vadd.f32 0.0, %v1256
    %v1258 = vpop.f32.mrb[0].mxu0
    %1259 = vmatprep.mubr.f32.mxu0 0.0
    %1260 = vmatmul.mubr.f32.gmra.mrb[0].mxu0 %v310
    %v1261 = vpop.f32.mrb[0].mxu0
    %v1262 = vadd.f32 0.0, %v1261
    %v1263 = vpop.f32.mrb[0].mxu0
    %1264 = vmatprep.mubr.f32.mxu0 0.0
    %1265 = vmatmul.mubr.f32.gmra.mrb[0].mxu0 %v313
    %v1266 = vpop.f32.mrb[0].mxu0
    %v1267 = vadd.f32 0.0, %v1266
    %v1268 = vpop.f32.mrb[0].mxu0
    %1269 = vmatprep.mubr.f32.mxu0 0.0
    %1270 = vmatmul.mubr.f32.gmra.mrb[0].mxu0 %v316
    %v1271 = vpop.f32.mrb[0].mxu0
    %v1272 = vadd.f32 0.0, %v1271
    %v1273 = vpop.f32.mrb[0].mxu0
    %1274 = vmatprep.mubr.f32.mxu0 0.0
    %1275 = vmatmul.mubr.f32.gmra.mrb[0].mxu0 %v319
    %v1276 = vpop.f32.mrb[0].mxu0
    %v1277 = vadd.f32 0.0, %v1276
    %v1278 = vpop.f32.mrb[0].mxu0
    %1279 = vmatprep.mubr.f32.mxu0 0.0
    %1280 = vmatmul.mubr.f32.gmra.mrb[0].mxu0 %v322
    %v1281 = vpop.f32.mrb[0].mxu0
    %v1282 = vadd.f32 0.0, %v1281
    %v1283 = vpop.f32.mrb[0].mxu0
    %1284 = vdwg.mxu0
    %v1285 = vadd.f32 %v1124, %v1207
    %v1286 = vadd.f32 %v1125, %v1212
    %v1287 = vadd.f32 %v1126, %v1217
    %v1288 = vadd.f32 %v1127, %v1222
    %v1289 = vadd.f32 %v1128, %v1227
    %v1290 = vadd.f32 %v1129, %v1232
    %v1291 = vadd.f32 %v1130, %v1237
    %v1292 = vadd.f32 %v1131, %v1242
    %v1293 = vadd.f32 %v1132, %v1247
    %v1294 = vadd.f32 %v1133, %v1252
    %v1295 = vadd.f32 %v1134, %v1257
    %v1296 = vadd.f32 %v1135, %v1262
    %v1297 = vadd.f32 %v1136, %v1267
    %v1298 = vadd.f32 %v1137, %v1272
    %v1299 = vadd.f32 %v1138, %v1277
    %v1300 = vadd.f32 %v1139, %v1282
    %v1301 = vtanh.pop %v1285
    %v1302 = vtanh.pop %v1286
    %v1303 = vtanh.pop %v1287
    %v1304 = vtanh.pop %v1288
    %v1305 = vtanh.pop %v1289
    %v1306 = vtanh.pop %v1290
    %v1307 = vtanh.pop %v1291
    %v1308 = vtanh.pop %v1292
    %v1309 = vtanh.pop %v1293
    %v1310 = vtanh.pop %v1294
    %v1311 = vtanh.pop %v1295
    %v1312 = vtanh.pop %v1296
    %v1313 = vtanh.pop %v1297
    %v1314 = vtanh.pop %v1298
    %v1315 = vtanh.pop %v1299
    %v1316 = vtanh.pop %v1300
    %v1317 = vmul.f32 %v1301, 0.5
    %v1318 = vmul.f32 %v1302, 0.5
    %v1319 = vmul.f32 %v1303, 0.5
    %v1320 = vmul.f32 %v1304, 0.5
    %v1321 = vadd.f32 %v1317, 0.5
    %v1322 = vadd.f32 %v1318, 0.5
    %v1323 = vadd.f32 %v1319, 0.5
    %v1324 = vadd.f32 %v1320, 0.5
    %v1325 = vmul.f32 %v1305, 0.5
    %v1326 = vmul.f32 %v1306, 0.5
    %v1327 = vmul.f32 %v1307, 0.5
    %v1328 = vmul.f32 %v1308, 0.5
    %v1329 = vadd.f32 %v1325, 0.5
    %v1330 = vadd.f32 %v1326, 0.5
    %v1331 = vadd.f32 %v1327, 0.5
    %v1332 = vadd.f32 %v1328, 0.5
    %v1333 = vmul.f32 %v1313, 0.5
    %v1334 = vmul.f32 %v1314, 0.5
    %v1335 = vmul.f32 %v1315, 0.5
    %v1336 = vmul.f32 %v1316, 0.5
    %v1337 = vadd.f32 %v1333, 0.5
    %v1338 = vadd.f32 %v1334, 0.5
    %v1339 = vadd.f32 %v1335, 0.5
    %v1340 = vadd.f32 %v1336, 0.5
    %v1341 = vmul.f32 %v1329, %v1100
    %v1342 = vmul.f32 %v1330, %v1101
    %v1343 = vmul.f32 %v1331, %v1102
    %v1344 = vmul.f32 %v1332, %v1103
    %v1345 = vmul.f32 %v1321, %v1309
    %v1346 = vmul.f32 %v1322, %v1310
    %v1347 = vmul.f32 %v1323, %v1311
    %v1348 = vmul.f32 %v1324, %v1312
    %v1349 = vadd.f32 %v1341, %v1345
    %v1350 = vadd.f32 %v1342, %v1346
    %v1351 = vadd.f32 %v1343, %v1347
    %v1352 = vadd.f32 %v1344, %v1348
    %v1353 = vtanh.pop %v1349
    %v1354 = vtanh.pop %v1350
    %v1355 = vtanh.pop %v1351
    %v1356 = vtanh.pop %v1352
    %v1357 = vmul.f32 %v1337, %v1353
    %v1358 = vmul.f32 %v1338, %v1354
    %v1359 = vmul.f32 %v1339, %v1355
    %v1360 = vmul.f32 %v1340, %v1356
    %vm1361 = vcmp.gt.s32.totalorder %v78, 3
    %v1362 = vsel %vm1361, 1, 0
    %v1363 = vlaneseq
    %v1364 = vshrl.u32 %v1363, 7
    %v1365 = vsub.s32 0, %v1364
    %v1366 = vrot.slane %v1362, %v1365
    %vm1367 = vcmp.eq.s32.totalorder %v1366, 1
    %v1368 = vsel %vm1367, %v1357, %v1096
    %v1369 = vsel %vm1367, %v1358, %v1097
    %v1370 = vsel %vm1367, %v1359, %v1098
    %v1371 = vsel %vm1367, %v1360, %v1099
    %v1372 = vsel %vm1367, %v1349, %v1100
    %v1373 = vsel %vm1367, %v1350, %v1101
    %v1374 = vsel %vm1367, %v1351, %v1102
    %v1375 = vsel %vm1367, %v1352, %v1103
    %v1376 = vlaneseq
    %v1377 = vshrl.u32 %v1376, 7
    %v1378 = vsub.s32 4, %v1377
    %v1379 = vrot.slane %v77, %v1378
    %v1380 = vmul.f32 %v82, %v1379
    %v1381 = vmul.f32 %v87, %v1379
    %v1382 = vmul.f32 %v92, %v1379
    %v1383 = vmul.f32 %v97, %v1379
    %v1384 = vmul.f32 %v102, %v1379
    %v1385 = vmul.f32 %v107, %v1379
    %v1386 = vmul.f32 %v112, %v1379
    %v1387 = vmul.f32 %v117, %v1379
    %v1388 = vmul.f32 %v122, %v1379
    %v1389 = vmul.f32 %v127, %v1379
    %v1390 = vmul.f32 %v132, %v1379
    %v1391 = vmul.f32 %v137, %v1379
    %v1392 = vmul.f32 %v142, %v1379
    %v1393 = vmul.f32 %v147, %v1379
    %v1394 = vmul.f32 %v152, %v1379
    %v1395 = vmul.f32 %v157, %v1379
    %v1396 = vadd.f32 %v1380, %v182
    %v1397 = vadd.f32 %v1381, %v187
    %v1398 = vadd.f32 %v1382, %v192
    %v1399 = vadd.f32 %v1383, %v197
    %v1400 = vadd.f32 %v1384, %v202
    %v1401 = vadd.f32 %v1385, %v207
    %v1402 = vadd.f32 %v1386, %v212
    %v1403 = vadd.f32 %v1387, %v217
    %v1404 = vadd.f32 %v1388, %v222
    %v1405 = vadd.f32 %v1389, %v227
    %v1406 = vadd.f32 %v1390, %v232
    %v1407 = vadd.f32 %v1391, %v237
    %v1408 = vadd.f32 %v1392, %v242
    %v1409 = vadd.f32 %v1393, %v247
    %v1410 = vadd.f32 %v1394, %v252
    %v1411 = vadd.f32 %v1395, %v257
    %1412 = vmatprep.subr.mxu0 0.0
    %1413 = vmatpush1.msra.mxu0 %v1368
    %1414 = vmatprep.subr.mxu0 0.0
    %1415 = vmatpush1.msra.mxu0 %v1369
    %1416 = vmatprep.subr.mxu0 0.0
    %1417 = vmatpush1.msra.mxu0 %v1370
    %1418 = vmatprep.subr.mxu0 0.0
    %1419 = vmatpush1.msra.mxu0 %v1371
    %1420 = vmatprep.subr.mxu0 0.0
    %1421 = vmatpush1.msra.mxu0 0.0
    %1422 = vmatprep.subr.mxu0 0.0
    %1423 = vmatpush1.msra.mxu0 0.0
    %1424 = vmatprep.subr.mxu0 0.0
    %1425 = vmatpush1.msra.mxu0 0.0
    %1426 = vmatprep.subr.mxu0 0.0
    %1427 = vmatpush1.msra.mxu0 0.0
    %1428 = vmatprep.subr.mxu0 0.0
    %1429 = vmatpush1.msra.mxu0 0.0
    %1430 = vmatprep.subr.mxu0 0.0
    %1431 = vmatpush1.msra.mxu0 0.0
    %1432 = vmatprep.subr.mxu0 0.0
    %1433 = vmatpush1.msra.mxu0 0.0
    %1434 = vmatprep.subr.mxu0 0.0
    %1435 = vmatpush1.msra.mxu0 0.0
    %1436 = vmatprep.subr.mxu0 0.0
    %1437 = vmatpush1.msra.mxu0 0.0
    %1438 = vmatprep.subr.mxu0 0.0
    %1439 = vmatpush1.msra.mxu0 0.0
    %1440 = vmatprep.subr.mxu0 0.0
    %1441 = vmatpush1.msra.mxu0 0.0
    %1442 = vmatprep.subr.mxu0 0.0
    %1443 = vmatpush1.msra.mxu0 0.0
    %1444 = vmatprep.subr.mxu0 0.0
    %1445 = vmatpush1.msra.mxu0 0.0
    %1446 = vmatprep.subr.mxu0 0.0
    %1447 = vmatpush1.msra.mxu0 0.0
    %1448 = vmatprep.subr.mxu0 0.0
    %1449 = vmatpush1.msra.mxu0 0.0
    %1450 = vmatprep.subr.mxu0 0.0
    %1451 = vmatpush1.msra.mxu0 0.0
    %1452 = vmatprep.subr.mxu0 0.0
    %1453 = vmatpush1.msra.mxu0 0.0
    %1454 = vmatprep.subr.mxu0 0.0
    %1455 = vmatpush1.msra.mxu0 0.0
    %1456 = vmatprep.subr.mxu0 0.0
    %1457 = vmatpush1.msra.mxu0 0.0
    %1458 = vmatprep.subr.mxu0 0.0
    %1459 = vmatpush1.msra.mxu0 0.0
    %1460 = vmatprep.subr.mxu0 0.0
    %1461 = vmatpush1.msra.mxu0 0.0
    %1462 = vmatprep.subr.mxu0 0.0
    %1463 = vmatpush1.msra.mxu0 0.0
    %1464 = vmatprep.subr.mxu0 0.0
    %1465 = vmatpush1.msra.mxu0 0.0
    %1466 = vmatprep.subr.mxu0 0.0
    %1467 = vmatpush1.msra.mxu0 0.0
    %1468 = vmatprep.subr.mxu0 0.0
    %1469 = vmatpush1.msra.mxu0 0.0
    %1470 = vmatprep.subr.mxu0 0.0
    %1471 = vmatpush1.msra.mxu0 0.0
    %1472 = vmatprep.subr.mxu0 0.0
    %1473 = vmatpush1.msra.mxu0 0.0
    %1474 = vmatprep.subr.mxu0 0.0
    %1475 = vmatpush1.msra.mxu0 0.0
    %1476 = vmatprep.mubr.f32.mxu0 0.0
    %1477 = vmatmul.mubr.f32.gmra.mrb[0].mxu0 %v277
    %v1478 = vpop.f32.mrb[0].mxu0
    %v1479 = vadd.f32 0.0, %v1478
    %v1480 = vpop.f32.mrb[0].mxu0
    %1481 = vmatprep.mubr.f32.mxu0 0.0
    %1482 = vmatmul.mubr.f32.gmra.mrb[0].mxu0 %v280
    %v1483 = vpop.f32.mrb[0].mxu0
    %v1484 = vadd.f32 0.0, %v1483
    %v1485 = vpop.f32.mrb[0].mxu0
    %1486 = vmatprep.mubr.f32.mxu0 0.0
    %1487 = vmatmul.mubr.f32.gmra.mrb[0].mxu0 %v283
    %v1488 = vpop.f32.mrb[0].mxu0
    %v1489 = vadd.f32 0.0, %v1488
    %v1490 = vpop.f32.mrb[0].mxu0
    %1491 = vmatprep.mubr.f32.mxu0 0.0
    %1492 = vmatmul.mubr.f32.gmra.mrb[0].mxu0 %v286
    %v1493 = vpop.f32.mrb[0].mxu0
    %v1494 = vadd.f32 0.0, %v1493
    %v1495 = vpop.f32.mrb[0].mxu0
    %1496 = vmatprep.mubr.f32.mxu0 0.0
    %1497 = vmatmul.mubr.f32.gmra.mrb[0].mxu0 %v289
    %v1498 = vpop.f32.mrb[0].mxu0
    %v1499 = vadd.f32 0.0, %v1498
    %v1500 = vpop.f32.mrb[0].mxu0
    %1501 = vmatprep.mubr.f32.mxu0 0.0
    %1502 = vmatmul.mubr.f32.gmra.mrb[0].mxu0 %v292
    %v1503 = vpop.f32.mrb[0].mxu0
    %v1504 = vadd.f32 0.0, %v1503
    %v1505 = vpop.f32.mrb[0].mxu0
    %1506 = vmatprep.mubr.f32.mxu0 0.0
    %1507 = vmatmul.mubr.f32.gmra.mrb[0].mxu0 %v295
    %v1508 = vpop.f32.mrb[0].mxu0
    %v1509 = vadd.f32 0.0, %v1508
    %v1510 = vpop.f32.mrb[0].mxu0
    %1511 = vmatprep.mubr.f32.mxu0 0.0
    %1512 = vmatmul.mubr.f32.gmra.mrb[0].mxu0 %v298
    %v1513 = vpop.f32.mrb[0].mxu0
    %v1514 = vadd.f32 0.0, %v1513
    %v1515 = vpop.f32.mrb[0].mxu0
    %1516 = vmatprep.mubr.f32.mxu0 0.0
    %1517 = vmatmul.mubr.f32.gmra.mrb[0].mxu0 %v301
    %v1518 = vpop.f32.mrb[0].mxu0
    %v1519 = vadd.f32 0.0, %v1518
    %v1520 = vpop.f32.mrb[0].mxu0
    %1521 = vmatprep.mubr.f32.mxu0 0.0
    %1522 = vmatmul.mubr.f32.gmra.mrb[0].mxu0 %v304
    %v1523 = vpop.f32.mrb[0].mxu0
    %v1524 = vadd.f32 0.0, %v1523
    %v1525 = vpop.f32.mrb[0].mxu0
    %1526 = vmatprep.mubr.f32.mxu0 0.0
    %1527 = vmatmul.mubr.f32.gmra.mrb[0].mxu0 %v307
    %v1528 = vpop.f32.mrb[0].mxu0
    %v1529 = vadd.f32 0.0, %v1528
    %v1530 = vpop.f32.mrb[0].mxu0
    %1531 = vmatprep.mubr.f32.mxu0 0.0
    %1532 = vmatmul.mubr.f32.gmra.mrb[0].mxu0 %v310
    %v1533 = vpop.f32.mrb[0].mxu0
    %v1534 = vadd.f32 0.0, %v1533
    %v1535 = vpop.f32.mrb[0].mxu0
    %1536 = vmatprep.mubr.f32.mxu0 0.0
    %1537 = vmatmul.mubr.f32.gmra.mrb[0].mxu0 %v313
    %v1538 = vpop.f32.mrb[0].mxu0
    %v1539 = vadd.f32 0.0, %v1538
    %v1540 = vpop.f32.mrb[0].mxu0
    %1541 = vmatprep.mubr.f32.mxu0 0.0
    %1542 = vmatmul.mubr.f32.gmra.mrb[0].mxu0 %v316
    %v1543 = vpop.f32.mrb[0].mxu0
    %v1544 = vadd.f32 0.0, %v1543
    %v1545 = vpop.f32.mrb[0].mxu0
    %1546 = vmatprep.mubr.f32.mxu0 0.0
    %1547 = vmatmul.mubr.f32.gmra.mrb[0].mxu0 %v319
    %v1548 = vpop.f32.mrb[0].mxu0
    %v1549 = vadd.f32 0.0, %v1548
    %v1550 = vpop.f32.mrb[0].mxu0
    %1551 = vmatprep.mubr.f32.mxu0 0.0
    %1552 = vmatmul.mubr.f32.gmra.mrb[0].mxu0 %v322
    %v1553 = vpop.f32.mrb[0].mxu0
    %v1554 = vadd.f32 0.0, %v1553
    %v1555 = vpop.f32.mrb[0].mxu0
    %1556 = vdwg.mxu0
    %v1557 = vadd.f32 %v1396, %v1479
    %v1558 = vadd.f32 %v1397, %v1484
    %v1559 = vadd.f32 %v1398, %v1489
    %v1560 = vadd.f32 %v1399, %v1494
    %v1561 = vadd.f32 %v1400, %v1499
    %v1562 = vadd.f32 %v1401, %v1504
    %v1563 = vadd.f32 %v1402, %v1509
    %v1564 = vadd.f32 %v1403, %v1514
    %v1565 = vadd.f32 %v1404, %v1519
    %v1566 = vadd.f32 %v1405, %v1524
    %v1567 = vadd.f32 %v1406, %v1529
    %v1568 = vadd.f32 %v1407, %v1534
    %v1569 = vadd.f32 %v1408, %v1539
    %v1570 = vadd.f32 %v1409, %v1544
    %v1571 = vadd.f32 %v1410, %v1549
    %v1572 = vadd.f32 %v1411, %v1554
    %v1573 = vtanh.pop %v1557
    %v1574 = vtanh.pop %v1558
    %v1575 = vtanh.pop %v1559
    %v1576 = vtanh.pop %v1560
    %v1577 = vtanh.pop %v1561
    %v1578 = vtanh.pop %v1562
    %v1579 = vtanh.pop %v1563
    %v1580 = vtanh.pop %v1564
    %v1581 = vtanh.pop %v1565
    %v1582 = vtanh.pop %v1566
    %v1583 = vtanh.pop %v1567
    %v1584 = vtanh.pop %v1568
    %v1585 = vtanh.pop %v1569
    %v1586 = vtanh.pop %v1570
    %v1587 = vtanh.pop %v1571
    %v1588 = vtanh.pop %v1572
    %v1589 = vmul.f32 %v1573, 0.5
    %v1590 = vmul.f32 %v1574, 0.5
    %v1591 = vmul.f32 %v1575, 0.5
    %v1592 = vmul.f32 %v1576, 0.5
    %v1593 = vadd.f32 %v1589, 0.5
    %v1594 = vadd.f32 %v1590, 0.5
    %v1595 = vadd.f32 %v1591, 0.5
    %v1596 = vadd.f32 %v1592, 0.5
    %v1597 = vmul.f32 %v1577, 0.5
    %v1598 = vmul.f32 %v1578, 0.5
    %v1599 = vmul.f32 %v1579, 0.5
    %v1600 = vmul.f32 %v1580, 0.5
    %v1601 = vadd.f32 %v1597, 0.5
    %v1602 = vadd.f32 %v1598, 0.5
    %v1603 = vadd.f32 %v1599, 0.5
    %v1604 = vadd.f32 %v1600, 0.5
    %v1605 = vmul.f32 %v1585, 0.5
    %v1606 = vmul.f32 %v1586, 0.5
    %v1607 = vmul.f32 %v1587, 0.5
    %v1608 = vmul.f32 %v1588, 0.5
    %v1609 = vadd.f32 %v1605, 0.5
    %v1610 = vadd.f32 %v1606, 0.5
    %v1611 = vadd.f32 %v1607, 0.5
    %v1612 = vadd.f32 %v1608, 0.5
    %v1613 = vmul.f32 %v1601, %v1372
    %v1614 = vmul.f32 %v1602, %v1373
    %v1615 = vmul.f32 %v1603, %v1374
    %v1616 = vmul.f32 %v1604, %v1375
    %v1617 = vmul.f32 %v1593, %v1581
    %v1618 = vmul.f32 %v1594, %v1582
    %v1619 = vmul.f32 %v1595, %v1583
    %v1620 = vmul.f32 %v1596, %v1584
    %v1621 = vadd.f32 %v1613, %v1617
    %v1622 = vadd.f32 %v1614, %v1618
    %v1623 = vadd.f32 %v1615, %v1619
    %v1624 = vadd.f32 %v1616, %v1620
    %v1625 = vtanh.pop %v1621
    %v1626 = vtanh.pop %v1622
    %v1627 = vtanh.pop %v1623
    %v1628 = vtanh.pop %v1624
    %v1629 = vmul.f32 %v1609, %v1625
    %v1630 = vmul.f32 %v1610, %v1626
    %v1631 = vmul.f32 %v1611, %v1627
    %v1632 = vmul.f32 %v1612, %v1628
    %vm1633 = vcmp.gt.s32.totalorder %v78, 4
    %v1634 = vsel %vm1633, 1, 0
    %v1635 = vlaneseq
    %v1636 = vshrl.u32 %v1635, 7
    %v1637 = vsub.s32 0, %v1636
    %v1638 = vrot.slane %v1634, %v1637
    %vm1639 = vcmp.eq.s32.totalorder %v1638, 1
    %v1640 = vsel %vm1639, %v1629, %v1368
    %v1641 = vsel %vm1639, %v1630, %v1369
    %v1642 = vsel %vm1639, %v1631, %v1370
    %v1643 = vsel %vm1639, %v1632, %v1371
    %v1644 = vsel %vm1639, %v1621, %v1372
    %v1645 = vsel %vm1639, %v1622, %v1373
    %v1646 = vsel %vm1639, %v1623, %v1374
    %v1647 = vsel %vm1639, %v1624, %v1375
    %v1648 = vlaneseq
    %v1649 = vshrl.u32 %v1648, 7
    %v1650 = vsub.s32 5, %v1649
    %v1651 = vrot.slane %v77, %v1650
    %v1652 = vmul.f32 %v82, %v1651
    %v1653 = vmul.f32 %v87, %v1651
    %v1654 = vmul.f32 %v92, %v1651
    %v1655 = vmul.f32 %v97, %v1651
    %v1656 = vmul.f32 %v102, %v1651
    %v1657 = vmul.f32 %v107, %v1651
    %v1658 = vmul.f32 %v112, %v1651
    %v1659 = vmul.f32 %v117, %v1651
    %v1660 = vmul.f32 %v122, %v1651
    %v1661 = vmul.f32 %v127, %v1651
    %v1662 = vmul.f32 %v132, %v1651
    %v1663 = vmul.f32 %v137, %v1651
    %v1664 = vmul.f32 %v142, %v1651
    %v1665 = vmul.f32 %v147, %v1651
    %v1666 = vmul.f32 %v152, %v1651
    %v1667 = vmul.f32 %v157, %v1651
    %v1668 = vadd.f32 %v1652, %v182
    %v1669 = vadd.f32 %v1653, %v187
    %v1670 = vadd.f32 %v1654, %v192
    %v1671 = vadd.f32 %v1655, %v197
    %v1672 = vadd.f32 %v1656, %v202
    %v1673 = vadd.f32 %v1657, %v207
    %v1674 = vadd.f32 %v1658, %v212
    %v1675 = vadd.f32 %v1659, %v217
    %v1676 = vadd.f32 %v1660, %v222
    %v1677 = vadd.f32 %v1661, %v227
    %v1678 = vadd.f32 %v1662, %v232
    %v1679 = vadd.f32 %v1663, %v237
    %v1680 = vadd.f32 %v1664, %v242
    %v1681 = vadd.f32 %v1665, %v247
    %v1682 = vadd.f32 %v1666, %v252
    %v1683 = vadd.f32 %v1667, %v257
    %1684 = vmatprep.subr.mxu0 0.0
    %1685 = vmatpush1.msra.mxu0 %v1640
    %1686 = vmatprep.subr.mxu0 0.0
    %1687 = vmatpush1.msra.mxu0 %v1641
    %1688 = vmatprep.subr.mxu0 0.0
    %1689 = vmatpush1.msra.mxu0 %v1642
    %1690 = vmatprep.subr.mxu0 0.0
    %1691 = vmatpush1.msra.mxu0 %v1643
    %1692 = vmatprep.subr.mxu0 0.0
    %1693 = vmatpush1.msra.mxu0 0.0
    %1694 = vmatprep.subr.mxu0 0.0
    %1695 = vmatpush1.msra.mxu0 0.0
    %1696 = vmatprep.subr.mxu0 0.0
    %1697 = vmatpush1.msra.mxu0 0.0
    %1698 = vmatprep.subr.mxu0 0.0
    %1699 = vmatpush1.msra.mxu0 0.0
    %1700 = vmatprep.subr.mxu0 0.0
    %1701 = vmatpush1.msra.mxu0 0.0
    %1702 = vmatprep.subr.mxu0 0.0
    %1703 = vmatpush1.msra.mxu0 0.0
    %1704 = vmatprep.subr.mxu0 0.0
    %1705 = vmatpush1.msra.mxu0 0.0
    %1706 = vmatprep.subr.mxu0 0.0
    %1707 = vmatpush1.msra.mxu0 0.0
    %1708 = vmatprep.subr.mxu0 0.0
    %1709 = vmatpush1.msra.mxu0 0.0
    %1710 = vmatprep.subr.mxu0 0.0
    %1711 = vmatpush1.msra.mxu0 0.0
    %1712 = vmatprep.subr.mxu0 0.0
    %1713 = vmatpush1.msra.mxu0 0.0
    %1714 = vmatprep.subr.mxu0 0.0
    %1715 = vmatpush1.msra.mxu0 0.0
    %1716 = vmatprep.subr.mxu0 0.0
    %1717 = vmatpush1.msra.mxu0 0.0
    %1718 = vmatprep.subr.mxu0 0.0
    %1719 = vmatpush1.msra.mxu0 0.0
    %1720 = vmatprep.subr.mxu0 0.0
    %1721 = vmatpush1.msra.mxu0 0.0
    %1722 = vmatprep.subr.mxu0 0.0
    %1723 = vmatpush1.msra.mxu0 0.0
    %1724 = vmatprep.subr.mxu0 0.0
    %1725 = vmatpush1.msra.mxu0 0.0
    %1726 = vmatprep.subr.mxu0 0.0
    %1727 = vmatpush1.msra.mxu0 0.0
    %1728 = vmatprep.subr.mxu0 0.0
    %1729 = vmatpush1.msra.mxu0 0.0
    %1730 = vmatprep.subr.mxu0 0.0
    %1731 = vmatpush1.msra.mxu0 0.0
    %1732 = vmatprep.subr.mxu0 0.0
    %1733 = vmatpush1.msra.mxu0 0.0
    %1734 = vmatprep.subr.mxu0 0.0
    %1735 = vmatpush1.msra.mxu0 0.0
    %1736 = vmatprep.subr.mxu0 0.0
    %1737 = vmatpush1.msra.mxu0 0.0
    %1738 = vmatprep.subr.mxu0 0.0
    %1739 = vmatpush1.msra.mxu0 0.0
    %1740 = vmatprep.subr.mxu0 0.0
    %1741 = vmatpush1.msra.mxu0 0.0
    %1742 = vmatprep.subr.mxu0 0.0
    %1743 = vmatpush1.msra.mxu0 0.0
    %1744 = vmatprep.subr.mxu0 0.0
    %1745 = vmatpush1.msra.mxu0 0.0
    %1746 = vmatprep.subr.mxu0 0.0
    %1747 = vmatpush1.msra.mxu0 0.0
    %1748 = vmatprep.mubr.f32.mxu0 0.0
    %1749 = vmatmul.mubr.f32.gmra.mrb[0].mxu0 %v277
    %v1750 = vpop.f32.mrb[0].mxu0
    %v1751 = vadd.f32 0.0, %v1750
    %v1752 = vpop.f32.mrb[0].mxu0
    %1753 = vmatprep.mubr.f32.mxu0 0.0
    %1754 = vmatmul.mubr.f32.gmra.mrb[0].mxu0 %v280
    %v1755 = vpop.f32.mrb[0].mxu0
    %v1756 = vadd.f32 0.0, %v1755
    %v1757 = vpop.f32.mrb[0].mxu0
    %1758 = vmatprep.mubr.f32.mxu0 0.0
    %1759 = vmatmul.mubr.f32.gmra.mrb[0].mxu0 %v283
    %v1760 = vpop.f32.mrb[0].mxu0
    %v1761 = vadd.f32 0.0, %v1760
    %v1762 = vpop.f32.mrb[0].mxu0
    %1763 = vmatprep.mubr.f32.mxu0 0.0
    %1764 = vmatmul.mubr.f32.gmra.mrb[0].mxu0 %v286
    %v1765 = vpop.f32.mrb[0].mxu0
    %v1766 = vadd.f32 0.0, %v1765
    %v1767 = vpop.f32.mrb[0].mxu0
    %1768 = vmatprep.mubr.f32.mxu0 0.0
    %1769 = vmatmul.mubr.f32.gmra.mrb[0].mxu0 %v289
    %v1770 = vpop.f32.mrb[0].mxu0
    %v1771 = vadd.f32 0.0, %v1770
    %v1772 = vpop.f32.mrb[0].mxu0
    %1773 = vmatprep.mubr.f32.mxu0 0.0
    %1774 = vmatmul.mubr.f32.gmra.mrb[0].mxu0 %v292
    %v1775 = vpop.f32.mrb[0].mxu0
    %v1776 = vadd.f32 0.0, %v1775
    %v1777 = vpop.f32.mrb[0].mxu0
    %1778 = vmatprep.mubr.f32.mxu0 0.0
    %1779 = vmatmul.mubr.f32.gmra.mrb[0].mxu0 %v295
    %v1780 = vpop.f32.mrb[0].mxu0
    %v1781 = vadd.f32 0.0, %v1780
    %v1782 = vpop.f32.mrb[0].mxu0
    %1783 = vmatprep.mubr.f32.mxu0 0.0
    %1784 = vmatmul.mubr.f32.gmra.mrb[0].mxu0 %v298
    %v1785 = vpop.f32.mrb[0].mxu0
    %v1786 = vadd.f32 0.0, %v1785
    %v1787 = vpop.f32.mrb[0].mxu0
    %1788 = vmatprep.mubr.f32.mxu0 0.0
    %1789 = vmatmul.mubr.f32.gmra.mrb[0].mxu0 %v301
    %v1790 = vpop.f32.mrb[0].mxu0
    %v1791 = vadd.f32 0.0, %v1790
    %v1792 = vpop.f32.mrb[0].mxu0
    %1793 = vmatprep.mubr.f32.mxu0 0.0
    %1794 = vmatmul.mubr.f32.gmra.mrb[0].mxu0 %v304
    %v1795 = vpop.f32.mrb[0].mxu0
    %v1796 = vadd.f32 0.0, %v1795
    %v1797 = vpop.f32.mrb[0].mxu0
    %1798 = vmatprep.mubr.f32.mxu0 0.0
    %1799 = vmatmul.mubr.f32.gmra.mrb[0].mxu0 %v307
    %v1800 = vpop.f32.mrb[0].mxu0
    %v1801 = vadd.f32 0.0, %v1800
    %v1802 = vpop.f32.mrb[0].mxu0
    %1803 = vmatprep.mubr.f32.mxu0 0.0
    %1804 = vmatmul.mubr.f32.gmra.mrb[0].mxu0 %v310
    %v1805 = vpop.f32.mrb[0].mxu0
    %v1806 = vadd.f32 0.0, %v1805
    %v1807 = vpop.f32.mrb[0].mxu0
    %1808 = vmatprep.mubr.f32.mxu0 0.0
    %1809 = vmatmul.mubr.f32.gmra.mrb[0].mxu0 %v313
    %v1810 = vpop.f32.mrb[0].mxu0
    %v1811 = vadd.f32 0.0, %v1810
    %v1812 = vpop.f32.mrb[0].mxu0
    %1813 = vmatprep.mubr.f32.mxu0 0.0
    %1814 = vmatmul.mubr.f32.gmra.mrb[0].mxu0 %v316
    %v1815 = vpop.f32.mrb[0].mxu0
    %v1816 = vadd.f32 0.0, %v1815
    %v1817 = vpop.f32.mrb[0].mxu0
    %1818 = vmatprep.mubr.f32.mxu0 0.0
    %1819 = vmatmul.mubr.f32.gmra.mrb[0].mxu0 %v319
    %v1820 = vpop.f32.mrb[0].mxu0
    %v1821 = vadd.f32 0.0, %v1820
    %v1822 = vpop.f32.mrb[0].mxu0
    %1823 = vmatprep.mubr.f32.mxu0 0.0
    %1824 = vmatmul.mubr.f32.gmra.mrb[0].mxu0 %v322
    %v1825 = vpop.f32.mrb[0].mxu0
    %v1826 = vadd.f32 0.0, %v1825
    %v1827 = vpop.f32.mrb[0].mxu0
    %1828 = vdwg.mxu0
    %v1829 = vadd.f32 %v1668, %v1751
    %v1830 = vadd.f32 %v1669, %v1756
    %v1831 = vadd.f32 %v1670, %v1761
    %v1832 = vadd.f32 %v1671, %v1766
    %v1833 = vadd.f32 %v1672, %v1771
    %v1834 = vadd.f32 %v1673, %v1776
    %v1835 = vadd.f32 %v1674, %v1781
    %v1836 = vadd.f32 %v1675, %v1786
    %v1837 = vadd.f32 %v1676, %v1791
    %v1838 = vadd.f32 %v1677, %v1796
    %v1839 = vadd.f32 %v1678, %v1801
    %v1840 = vadd.f32 %v1679, %v1806
    %v1841 = vadd.f32 %v1680, %v1811
    %v1842 = vadd.f32 %v1681, %v1816
    %v1843 = vadd.f32 %v1682, %v1821
    %v1844 = vadd.f32 %v1683, %v1826
    %v1845 = vtanh.pop %v1829
    %v1846 = vtanh.pop %v1830
    %v1847 = vtanh.pop %v1831
    %v1848 = vtanh.pop %v1832
    %v1849 = vtanh.pop %v1833
    %v1850 = vtanh.pop %v1834
    %v1851 = vtanh.pop %v1835
    %v1852 = vtanh.pop %v1836
    %v1853 = vtanh.pop %v1837
    %v1854 = vtanh.pop %v1838
    %v1855 = vtanh.pop %v1839
    %v1856 = vtanh.pop %v1840
    %v1857 = vtanh.pop %v1841
    %v1858 = vtanh.pop %v1842
    %v1859 = vtanh.pop %v1843
    %v1860 = vtanh.pop %v1844
    %v1861 = vmul.f32 %v1845, 0.5
    %v1862 = vmul.f32 %v1846, 0.5
    %v1863 = vmul.f32 %v1847, 0.5
    %v1864 = vmul.f32 %v1848, 0.5
    %v1865 = vadd.f32 %v1861, 0.5
    %v1866 = vadd.f32 %v1862, 0.5
    %v1867 = vadd.f32 %v1863, 0.5
    %v1868 = vadd.f32 %v1864, 0.5
    %v1869 = vmul.f32 %v1849, 0.5
    %v1870 = vmul.f32 %v1850, 0.5
    %v1871 = vmul.f32 %v1851, 0.5
    %v1872 = vmul.f32 %v1852, 0.5
    %v1873 = vadd.f32 %v1869, 0.5
    %v1874 = vadd.f32 %v1870, 0.5
    %v1875 = vadd.f32 %v1871, 0.5
    %v1876 = vadd.f32 %v1872, 0.5
    %v1877 = vmul.f32 %v1857, 0.5
    %v1878 = vmul.f32 %v1858, 0.5
    %v1879 = vmul.f32 %v1859, 0.5
    %v1880 = vmul.f32 %v1860, 0.5
    %v1881 = vadd.f32 %v1877, 0.5
    %v1882 = vadd.f32 %v1878, 0.5
    %v1883 = vadd.f32 %v1879, 0.5
    %v1884 = vadd.f32 %v1880, 0.5
    %v1885 = vmul.f32 %v1873, %v1644
    %v1886 = vmul.f32 %v1874, %v1645
    %v1887 = vmul.f32 %v1875, %v1646
    %v1888 = vmul.f32 %v1876, %v1647
    %v1889 = vmul.f32 %v1865, %v1853
    %v1890 = vmul.f32 %v1866, %v1854
    %v1891 = vmul.f32 %v1867, %v1855
    %v1892 = vmul.f32 %v1868, %v1856
    %v1893 = vadd.f32 %v1885, %v1889
    %v1894 = vadd.f32 %v1886, %v1890
    %v1895 = vadd.f32 %v1887, %v1891
    %v1896 = vadd.f32 %v1888, %v1892
    %v1897 = vtanh.pop %v1893
    %v1898 = vtanh.pop %v1894
    %v1899 = vtanh.pop %v1895
    %v1900 = vtanh.pop %v1896
    %v1901 = vmul.f32 %v1881, %v1897
    %v1902 = vmul.f32 %v1882, %v1898
    %v1903 = vmul.f32 %v1883, %v1899
    %v1904 = vmul.f32 %v1884, %v1900
    %vm1905 = vcmp.gt.s32.totalorder %v78, 5
    %v1906 = vsel %vm1905, 1, 0
    %v1907 = vlaneseq
    %v1908 = vshrl.u32 %v1907, 7
    %v1909 = vsub.s32 0, %v1908
    %v1910 = vrot.slane %v1906, %v1909
    %vm1911 = vcmp.eq.s32.totalorder %v1910, 1
    %v1912 = vsel %vm1911, %v1901, %v1640
    %v1913 = vsel %vm1911, %v1902, %v1641
    %v1914 = vsel %vm1911, %v1903, %v1642
    %v1915 = vsel %vm1911, %v1904, %v1643
    %v1916 = vsel %vm1911, %v1893, %v1644
    %v1917 = vsel %vm1911, %v1894, %v1645
    %v1918 = vsel %vm1911, %v1895, %v1646
    %v1919 = vsel %vm1911, %v1896, %v1647
    %v1920 = vlaneseq
    %v1921 = vshrl.u32 %v1920, 7
    %v1922 = vsub.s32 6, %v1921
    %v1923 = vrot.slane %v77, %v1922
    %v1924 = vmul.f32 %v82, %v1923
    %v1925 = vmul.f32 %v87, %v1923
    %v1926 = vmul.f32 %v92, %v1923
    %v1927 = vmul.f32 %v97, %v1923
    %v1928 = vmul.f32 %v102, %v1923
    %v1929 = vmul.f32 %v107, %v1923
    %v1930 = vmul.f32 %v112, %v1923
    %v1931 = vmul.f32 %v117, %v1923
    %v1932 = vmul.f32 %v122, %v1923
    %v1933 = vmul.f32 %v127, %v1923
    %v1934 = vmul.f32 %v132, %v1923
    %v1935 = vmul.f32 %v137, %v1923
    %v1936 = vmul.f32 %v142, %v1923
    %v1937 = vmul.f32 %v147, %v1923
    %v1938 = vmul.f32 %v152, %v1923
    %v1939 = vmul.f32 %v157, %v1923
    %v1940 = vadd.f32 %v1924, %v182
    %v1941 = vadd.f32 %v1925, %v187
    %v1942 = vadd.f32 %v1926, %v192
    %v1943 = vadd.f32 %v1927, %v197
    %v1944 = vadd.f32 %v1928, %v202
    %v1945 = vadd.f32 %v1929, %v207
    %v1946 = vadd.f32 %v1930, %v212
    %v1947 = vadd.f32 %v1931, %v217
    %v1948 = vadd.f32 %v1932, %v222
    %v1949 = vadd.f32 %v1933, %v227
    %v1950 = vadd.f32 %v1934, %v232
    %v1951 = vadd.f32 %v1935, %v237
    %v1952 = vadd.f32 %v1936, %v242
    %v1953 = vadd.f32 %v1937, %v247
    %v1954 = vadd.f32 %v1938, %v252
    %v1955 = vadd.f32 %v1939, %v257
    %1956 = vmatprep.subr.mxu0 0.0
    %1957 = vmatpush1.msra.mxu0 %v1912
    %1958 = vmatprep.subr.mxu0 0.0
    %1959 = vmatpush1.msra.mxu0 %v1913
    %1960 = vmatprep.subr.mxu0 0.0
    %1961 = vmatpush1.msra.mxu0 %v1914
    %1962 = vmatprep.subr.mxu0 0.0
    %1963 = vmatpush1.msra.mxu0 %v1915
    %1964 = vmatprep.subr.mxu0 0.0
    %1965 = vmatpush1.msra.mxu0 0.0
    %1966 = vmatprep.subr.mxu0 0.0
    %1967 = vmatpush1.msra.mxu0 0.0
    %1968 = vmatprep.subr.mxu0 0.0
    %1969 = vmatpush1.msra.mxu0 0.0
    %1970 = vmatprep.subr.mxu0 0.0
    %1971 = vmatpush1.msra.mxu0 0.0
    %1972 = vmatprep.subr.mxu0 0.0
    %1973 = vmatpush1.msra.mxu0 0.0
    %1974 = vmatprep.subr.mxu0 0.0
    %1975 = vmatpush1.msra.mxu0 0.0
    %1976 = vmatprep.subr.mxu0 0.0
    %1977 = vmatpush1.msra.mxu0 0.0
    %1978 = vmatprep.subr.mxu0 0.0
    %1979 = vmatpush1.msra.mxu0 0.0
    %1980 = vmatprep.subr.mxu0 0.0
    %1981 = vmatpush1.msra.mxu0 0.0
    %1982 = vmatprep.subr.mxu0 0.0
    %1983 = vmatpush1.msra.mxu0 0.0
    %1984 = vmatprep.subr.mxu0 0.0
    %1985 = vmatpush1.msra.mxu0 0.0
    %1986 = vmatprep.subr.mxu0 0.0
    %1987 = vmatpush1.msra.mxu0 0.0
    %1988 = vmatprep.subr.mxu0 0.0
    %1989 = vmatpush1.msra.mxu0 0.0
    %1990 = vmatprep.subr.mxu0 0.0
    %1991 = vmatpush1.msra.mxu0 0.0
    %1992 = vmatprep.subr.mxu0 0.0
    %1993 = vmatpush1.msra.mxu0 0.0
    %1994 = vmatprep.subr.mxu0 0.0
    %1995 = vmatpush1.msra.mxu0 0.0
    %1996 = vmatprep.subr.mxu0 0.0
    %1997 = vmatpush1.msra.mxu0 0.0
    %1998 = vmatprep.subr.mxu0 0.0
    %1999 = vmatpush1.msra.mxu0 0.0
    %2000 = vmatprep.subr.mxu0 0.0
    %2001 = vmatpush1.msra.mxu0 0.0
    %2002 = vmatprep.subr.mxu0 0.0
    %2003 = vmatpush1.msra.mxu0 0.0
    %2004 = vmatprep.subr.mxu0 0.0
    %2005 = vmatpush1.msra.mxu0 0.0
    %2006 = vmatprep.subr.mxu0 0.0
    %2007 = vmatpush1.msra.mxu0 0.0
    %2008 = vmatprep.subr.mxu0 0.0
    %2009 = vmatpush1.msra.mxu0 0.0
    %2010 = vmatprep.subr.mxu0 0.0
    %2011 = vmatpush1.msra.mxu0 0.0
    %2012 = vmatprep.subr.mxu0 0.0
    %2013 = vmatpush1.msra.mxu0 0.0
    %2014 = vmatprep.subr.mxu0 0.0
    %2015 = vmatpush1.msra.mxu0 0.0
    %2016 = vmatprep.subr.mxu0 0.0
    %2017 = vmatpush1.msra.mxu0 0.0
    %2018 = vmatprep.subr.mxu0 0.0
    %2019 = vmatpush1.msra.mxu0 0.0
    %2020 = vmatprep.mubr.f32.mxu0 0.0
    %2021 = vmatmul.mubr.f32.gmra.mrb[0].mxu0 %v277
    %v2022 = vpop.f32.mrb[0].mxu0
    %v2023 = vadd.f32 0.0, %v2022
    %v2024 = vpop.f32.mrb[0].mxu0
    %2025 = vmatprep.mubr.f32.mxu0 0.0
    %2026 = vmatmul.mubr.f32.gmra.mrb[0].mxu0 %v280
    %v2027 = vpop.f32.mrb[0].mxu0
    %v2028 = vadd.f32 0.0, %v2027
    %v2029 = vpop.f32.mrb[0].mxu0
    %2030 = vmatprep.mubr.f32.mxu0 0.0
    %2031 = vmatmul.mubr.f32.gmra.mrb[0].mxu0 %v283
    %v2032 = vpop.f32.mrb[0].mxu0
    %v2033 = vadd.f32 0.0, %v2032
    %v2034 = vpop.f32.mrb[0].mxu0
    %2035 = vmatprep.mubr.f32.mxu0 0.0
    %2036 = vmatmul.mubr.f32.gmra.mrb[0].mxu0 %v286
    %v2037 = vpop.f32.mrb[0].mxu0
    %v2038 = vadd.f32 0.0, %v2037
    %v2039 = vpop.f32.mrb[0].mxu0
    %2040 = vmatprep.mubr.f32.mxu0 0.0
    %2041 = vmatmul.mubr.f32.gmra.mrb[0].mxu0 %v289
    %v2042 = vpop.f32.mrb[0].mxu0
    %v2043 = vadd.f32 0.0, %v2042
    %v2044 = vpop.f32.mrb[0].mxu0
    %2045 = vmatprep.mubr.f32.mxu0 0.0
    %2046 = vmatmul.mubr.f32.gmra.mrb[0].mxu0 %v292
    %v2047 = vpop.f32.mrb[0].mxu0
    %v2048 = vadd.f32 0.0, %v2047
    %v2049 = vpop.f32.mrb[0].mxu0
    %2050 = vmatprep.mubr.f32.mxu0 0.0
    %2051 = vmatmul.mubr.f32.gmra.mrb[0].mxu0 %v295
    %v2052 = vpop.f32.mrb[0].mxu0
    %v2053 = vadd.f32 0.0, %v2052
    %v2054 = vpop.f32.mrb[0].mxu0
    %2055 = vmatprep.mubr.f32.mxu0 0.0
    %2056 = vmatmul.mubr.f32.gmra.mrb[0].mxu0 %v298
    %v2057 = vpop.f32.mrb[0].mxu0
    %v2058 = vadd.f32 0.0, %v2057
    %v2059 = vpop.f32.mrb[0].mxu0
    %2060 = vmatprep.mubr.f32.mxu0 0.0
    %2061 = vmatmul.mubr.f32.gmra.mrb[0].mxu0 %v301
    %v2062 = vpop.f32.mrb[0].mxu0
    %v2063 = vadd.f32 0.0, %v2062
    %v2064 = vpop.f32.mrb[0].mxu0
    %2065 = vmatprep.mubr.f32.mxu0 0.0
    %2066 = vmatmul.mubr.f32.gmra.mrb[0].mxu0 %v304
    %v2067 = vpop.f32.mrb[0].mxu0
    %v2068 = vadd.f32 0.0, %v2067
    %v2069 = vpop.f32.mrb[0].mxu0
    %2070 = vmatprep.mubr.f32.mxu0 0.0
    %2071 = vmatmul.mubr.f32.gmra.mrb[0].mxu0 %v307
    %v2072 = vpop.f32.mrb[0].mxu0
    %v2073 = vadd.f32 0.0, %v2072
    %v2074 = vpop.f32.mrb[0].mxu0
    %2075 = vmatprep.mubr.f32.mxu0 0.0
    %2076 = vmatmul.mubr.f32.gmra.mrb[0].mxu0 %v310
    %v2077 = vpop.f32.mrb[0].mxu0
    %v2078 = vadd.f32 0.0, %v2077
    %v2079 = vpop.f32.mrb[0].mxu0
    %2080 = vmatprep.mubr.f32.mxu0 0.0
    %2081 = vmatmul.mubr.f32.gmra.mrb[0].mxu0 %v313
    %v2082 = vpop.f32.mrb[0].mxu0
    %v2083 = vadd.f32 0.0, %v2082
    %v2084 = vpop.f32.mrb[0].mxu0
    %2085 = vmatprep.mubr.f32.mxu0 0.0
    %2086 = vmatmul.mubr.f32.gmra.mrb[0].mxu0 %v316
    %v2087 = vpop.f32.mrb[0].mxu0
    %v2088 = vadd.f32 0.0, %v2087
    %v2089 = vpop.f32.mrb[0].mxu0
    %2090 = vmatprep.mubr.f32.mxu0 0.0
    %2091 = vmatmul.mubr.f32.gmra.mrb[0].mxu0 %v319
    %v2092 = vpop.f32.mrb[0].mxu0
    %v2093 = vadd.f32 0.0, %v2092
    %v2094 = vpop.f32.mrb[0].mxu0
    %2095 = vmatprep.mubr.f32.mxu0 0.0
    %2096 = vmatmul.mubr.f32.gmra.mrb[0].mxu0 %v322
    %v2097 = vpop.f32.mrb[0].mxu0
    %v2098 = vadd.f32 0.0, %v2097
    %v2099 = vpop.f32.mrb[0].mxu0
    %2100 = vdwg.mxu0
    %v2101 = vadd.f32 %v1940, %v2023
    %v2102 = vadd.f32 %v1941, %v2028
    %v2103 = vadd.f32 %v1942, %v2033
    %v2104 = vadd.f32 %v1943, %v2038
    %v2105 = vadd.f32 %v1944, %v2043
    %v2106 = vadd.f32 %v1945, %v2048
    %v2107 = vadd.f32 %v1946, %v2053
    %v2108 = vadd.f32 %v1947, %v2058
    %v2109 = vadd.f32 %v1948, %v2063
    %v2110 = vadd.f32 %v1949, %v2068
    %v2111 = vadd.f32 %v1950, %v2073
    %v2112 = vadd.f32 %v1951, %v2078
    %v2113 = vadd.f32 %v1952, %v2083
    %v2114 = vadd.f32 %v1953, %v2088
    %v2115 = vadd.f32 %v1954, %v2093
    %v2116 = vadd.f32 %v1955, %v2098
    %v2117 = vtanh.pop %v2101
    %v2118 = vtanh.pop %v2102
    %v2119 = vtanh.pop %v2103
    %v2120 = vtanh.pop %v2104
    %v2121 = vtanh.pop %v2105
    %v2122 = vtanh.pop %v2106
    %v2123 = vtanh.pop %v2107
    %v2124 = vtanh.pop %v2108
    %v2125 = vtanh.pop %v2109
    %v2126 = vtanh.pop %v2110
    %v2127 = vtanh.pop %v2111
    %v2128 = vtanh.pop %v2112
    %v2129 = vtanh.pop %v2113
    %v2130 = vtanh.pop %v2114
    %v2131 = vtanh.pop %v2115
    %v2132 = vtanh.pop %v2116
    %v2133 = vmul.f32 %v2117, 0.5
    %v2134 = vmul.f32 %v2118, 0.5
    %v2135 = vmul.f32 %v2119, 0.5
    %v2136 = vmul.f32 %v2120, 0.5
    %v2137 = vadd.f32 %v2133, 0.5
    %v2138 = vadd.f32 %v2134, 0.5
    %v2139 = vadd.f32 %v2135, 0.5
    %v2140 = vadd.f32 %v2136, 0.5
    %v2141 = vmul.f32 %v2121, 0.5
    %v2142 = vmul.f32 %v2122, 0.5
    %v2143 = vmul.f32 %v2123, 0.5
    %v2144 = vmul.f32 %v2124, 0.5
    %v2145 = vadd.f32 %v2141, 0.5
    %v2146 = vadd.f32 %v2142, 0.5
    %v2147 = vadd.f32 %v2143, 0.5
    %v2148 = vadd.f32 %v2144, 0.5
    %v2149 = vmul.f32 %v2129, 0.5
    %v2150 = vmul.f32 %v2130, 0.5
    %v2151 = vmul.f32 %v2131, 0.5
    %v2152 = vmul.f32 %v2132, 0.5
    %v2153 = vadd.f32 %v2149, 0.5
    %v2154 = vadd.f32 %v2150, 0.5
    %v2155 = vadd.f32 %v2151, 0.5
    %v2156 = vadd.f32 %v2152, 0.5
    %v2157 = vmul.f32 %v2145, %v1916
    %v2158 = vmul.f32 %v2146, %v1917
    %v2159 = vmul.f32 %v2147, %v1918
    %v2160 = vmul.f32 %v2148, %v1919
    %v2161 = vmul.f32 %v2137, %v2125
    %v2162 = vmul.f32 %v2138, %v2126
    %v2163 = vmul.f32 %v2139, %v2127
    %v2164 = vmul.f32 %v2140, %v2128
    %v2165 = vadd.f32 %v2157, %v2161
    %v2166 = vadd.f32 %v2158, %v2162
    %v2167 = vadd.f32 %v2159, %v2163
    %v2168 = vadd.f32 %v2160, %v2164
    %v2169 = vtanh.pop %v2165
    %v2170 = vtanh.pop %v2166
    %v2171 = vtanh.pop %v2167
    %v2172 = vtanh.pop %v2168
    %v2173 = vmul.f32 %v2153, %v2169
    %v2174 = vmul.f32 %v2154, %v2170
    %v2175 = vmul.f32 %v2155, %v2171
    %v2176 = vmul.f32 %v2156, %v2172
    %vm2177 = vcmp.gt.s32.totalorder %v78, 6
    %v2178 = vsel %vm2177, 1, 0
    %v2179 = vlaneseq
    %v2180 = vshrl.u32 %v2179, 7
    %v2181 = vsub.s32 0, %v2180
    %v2182 = vrot.slane %v2178, %v2181
    %vm2183 = vcmp.eq.s32.totalorder %v2182, 1
    %v2184 = vsel %vm2183, %v2173, %v1912
    %v2185 = vsel %vm2183, %v2174, %v1913
    %v2186 = vsel %vm2183, %v2175, %v1914
    %v2187 = vsel %vm2183, %v2176, %v1915
    %v2188 = vsel %vm2183, %v2165, %v1916
    %v2189 = vsel %vm2183, %v2166, %v1917
    %v2190 = vsel %vm2183, %v2167, %v1918
    %v2191 = vsel %vm2183, %v2168, %v1919
    %v2192 = vlaneseq
    %v2193 = vshrl.u32 %v2192, 7
    %v2194 = vsub.s32 7, %v2193
    %v2195 = vrot.slane %v77, %v2194
    %v2196 = vmul.f32 %v82, %v2195
    %v2197 = vmul.f32 %v87, %v2195
    %v2198 = vmul.f32 %v92, %v2195
    %v2199 = vmul.f32 %v97, %v2195
    %v2200 = vmul.f32 %v102, %v2195
    %v2201 = vmul.f32 %v107, %v2195
    %v2202 = vmul.f32 %v112, %v2195
    %v2203 = vmul.f32 %v117, %v2195
    %v2204 = vmul.f32 %v122, %v2195
    %v2205 = vmul.f32 %v127, %v2195
    %v2206 = vmul.f32 %v132, %v2195
    %v2207 = vmul.f32 %v137, %v2195
    %v2208 = vmul.f32 %v142, %v2195
    %v2209 = vmul.f32 %v147, %v2195
    %v2210 = vmul.f32 %v152, %v2195
    %v2211 = vmul.f32 %v157, %v2195
    %v2212 = vadd.f32 %v2196, %v182
    %v2213 = vadd.f32 %v2197, %v187
    %v2214 = vadd.f32 %v2198, %v192
    %v2215 = vadd.f32 %v2199, %v197
    %v2216 = vadd.f32 %v2200, %v202
    %v2217 = vadd.f32 %v2201, %v207
    %v2218 = vadd.f32 %v2202, %v212
    %v2219 = vadd.f32 %v2203, %v217
    %v2220 = vadd.f32 %v2204, %v222
    %v2221 = vadd.f32 %v2205, %v227
    %v2222 = vadd.f32 %v2206, %v232
    %v2223 = vadd.f32 %v2207, %v237
    %v2224 = vadd.f32 %v2208, %v242
    %v2225 = vadd.f32 %v2209, %v247
    %v2226 = vadd.f32 %v2210, %v252
    %v2227 = vadd.f32 %v2211, %v257
    %2228 = vmatprep.subr.mxu0 0.0
    %2229 = vmatpush1.msra.mxu0 %v2184
    %2230 = vmatprep.subr.mxu0 0.0
    %2231 = vmatpush1.msra.mxu0 %v2185
    %2232 = vmatprep.subr.mxu0 0.0
    %2233 = vmatpush1.msra.mxu0 %v2186
    %2234 = vmatprep.subr.mxu0 0.0
    %2235 = vmatpush1.msra.mxu0 %v2187
    %2236 = vmatprep.subr.mxu0 0.0
    %2237 = vmatpush1.msra.mxu0 0.0
    %2238 = vmatprep.subr.mxu0 0.0
    %2239 = vmatpush1.msra.mxu0 0.0
    %2240 = vmatprep.subr.mxu0 0.0
    %2241 = vmatpush1.msra.mxu0 0.0
    %2242 = vmatprep.subr.mxu0 0.0
    %2243 = vmatpush1.msra.mxu0 0.0
    %2244 = vmatprep.subr.mxu0 0.0
    %2245 = vmatpush1.msra.mxu0 0.0
    %2246 = vmatprep.subr.mxu0 0.0
    %2247 = vmatpush1.msra.mxu0 0.0
    %2248 = vmatprep.subr.mxu0 0.0
    %2249 = vmatpush1.msra.mxu0 0.0
    %2250 = vmatprep.subr.mxu0 0.0
    %2251 = vmatpush1.msra.mxu0 0.0
    %2252 = vmatprep.subr.mxu0 0.0
    %2253 = vmatpush1.msra.mxu0 0.0
    %2254 = vmatprep.subr.mxu0 0.0
    %2255 = vmatpush1.msra.mxu0 0.0
    %2256 = vmatprep.subr.mxu0 0.0
    %2257 = vmatpush1.msra.mxu0 0.0
    %2258 = vmatprep.subr.mxu0 0.0
    %2259 = vmatpush1.msra.mxu0 0.0
    %2260 = vmatprep.subr.mxu0 0.0
    %2261 = vmatpush1.msra.mxu0 0.0
    %2262 = vmatprep.subr.mxu0 0.0
    %2263 = vmatpush1.msra.mxu0 0.0
    %2264 = vmatprep.subr.mxu0 0.0
    %2265 = vmatpush1.msra.mxu0 0.0
    %2266 = vmatprep.subr.mxu0 0.0
    %2267 = vmatpush1.msra.mxu0 0.0
    %2268 = vmatprep.subr.mxu0 0.0
    %2269 = vmatpush1.msra.mxu0 0.0
    %2270 = vmatprep.subr.mxu0 0.0
    %2271 = vmatpush1.msra.mxu0 0.0
    %2272 = vmatprep.subr.mxu0 0.0
    %2273 = vmatpush1.msra.mxu0 0.0
    %2274 = vmatprep.subr.mxu0 0.0
    %2275 = vmatpush1.msra.mxu0 0.0
    %2276 = vmatprep.subr.mxu0 0.0
    %2277 = vmatpush1.msra.mxu0 0.0
    %2278 = vmatprep.subr.mxu0 0.0
    %2279 = vmatpush1.msra.mxu0 0.0
    %2280 = vmatprep.subr.mxu0 0.0
    %2281 = vmatpush1.msra.mxu0 0.0
    %2282 = vmatprep.subr.mxu0 0.0
    %2283 = vmatpush1.msra.mxu0 0.0
    %2284 = vmatprep.subr.mxu0 0.0
    %2285 = vmatpush1.msra.mxu0 0.0
    %2286 = vmatprep.subr.mxu0 0.0
    %2287 = vmatpush1.msra.mxu0 0.0
    %2288 = vmatprep.subr.mxu0 0.0
    %2289 = vmatpush1.msra.mxu0 0.0
    %2290 = vmatprep.subr.mxu0 0.0
    %2291 = vmatpush1.msra.mxu0 0.0
    %2292 = vmatprep.mubr.f32.mxu0 0.0
    %2293 = vmatmul.mubr.f32.gmra.mrb[0].mxu0 %v277
    %v2294 = vpop.f32.mrb[0].mxu0
    %v2295 = vadd.f32 0.0, %v2294
    %v2296 = vpop.f32.mrb[0].mxu0
    %2297 = vmatprep.mubr.f32.mxu0 0.0
    %2298 = vmatmul.mubr.f32.gmra.mrb[0].mxu0 %v280
    %v2299 = vpop.f32.mrb[0].mxu0
    %v2300 = vadd.f32 0.0, %v2299
    %v2301 = vpop.f32.mrb[0].mxu0
    %2302 = vmatprep.mubr.f32.mxu0 0.0
    %2303 = vmatmul.mubr.f32.gmra.mrb[0].mxu0 %v283
    %v2304 = vpop.f32.mrb[0].mxu0
    %v2305 = vadd.f32 0.0, %v2304
    %v2306 = vpop.f32.mrb[0].mxu0
    %2307 = vmatprep.mubr.f32.mxu0 0.0
    %2308 = vmatmul.mubr.f32.gmra.mrb[0].mxu0 %v286
    %v2309 = vpop.f32.mrb[0].mxu0
    %v2310 = vadd.f32 0.0, %v2309
    %v2311 = vpop.f32.mrb[0].mxu0
    %2312 = vmatprep.mubr.f32.mxu0 0.0
    %2313 = vmatmul.mubr.f32.gmra.mrb[0].mxu0 %v289
    %v2314 = vpop.f32.mrb[0].mxu0
    %v2315 = vadd.f32 0.0, %v2314
    %v2316 = vpop.f32.mrb[0].mxu0
    %2317 = vmatprep.mubr.f32.mxu0 0.0
    %2318 = vmatmul.mubr.f32.gmra.mrb[0].mxu0 %v292
    %v2319 = vpop.f32.mrb[0].mxu0
    %v2320 = vadd.f32 0.0, %v2319
    %v2321 = vpop.f32.mrb[0].mxu0
    %2322 = vmatprep.mubr.f32.mxu0 0.0
    %2323 = vmatmul.mubr.f32.gmra.mrb[0].mxu0 %v295
    %v2324 = vpop.f32.mrb[0].mxu0
    %v2325 = vadd.f32 0.0, %v2324
    %v2326 = vpop.f32.mrb[0].mxu0
    %2327 = vmatprep.mubr.f32.mxu0 0.0
    %2328 = vmatmul.mubr.f32.gmra.mrb[0].mxu0 %v298
    %v2329 = vpop.f32.mrb[0].mxu0
    %v2330 = vadd.f32 0.0, %v2329
    %v2331 = vpop.f32.mrb[0].mxu0
    %2332 = vmatprep.mubr.f32.mxu0 0.0
    %2333 = vmatmul.mubr.f32.gmra.mrb[0].mxu0 %v301
    %v2334 = vpop.f32.mrb[0].mxu0
    %v2335 = vadd.f32 0.0, %v2334
    %v2336 = vpop.f32.mrb[0].mxu0
    %2337 = vmatprep.mubr.f32.mxu0 0.0
    %2338 = vmatmul.mubr.f32.gmra.mrb[0].mxu0 %v304
    %v2339 = vpop.f32.mrb[0].mxu0
    %v2340 = vadd.f32 0.0, %v2339
    %v2341 = vpop.f32.mrb[0].mxu0
    %2342 = vmatprep.mubr.f32.mxu0 0.0
    %2343 = vmatmul.mubr.f32.gmra.mrb[0].mxu0 %v307
    %v2344 = vpop.f32.mrb[0].mxu0
    %v2345 = vadd.f32 0.0, %v2344
    %v2346 = vpop.f32.mrb[0].mxu0
    %2347 = vmatprep.mubr.f32.mxu0 0.0
    %2348 = vmatmul.mubr.f32.gmra.mrb[0].mxu0 %v310
    %v2349 = vpop.f32.mrb[0].mxu0
    %v2350 = vadd.f32 0.0, %v2349
    %v2351 = vpop.f32.mrb[0].mxu0
    %2352 = vmatprep.mubr.f32.mxu0 0.0
    %2353 = vmatmul.mubr.f32.gmra.mrb[0].mxu0 %v313
    %v2354 = vpop.f32.mrb[0].mxu0
    %v2355 = vadd.f32 0.0, %v2354
    %v2356 = vpop.f32.mrb[0].mxu0
    %2357 = vmatprep.mubr.f32.mxu0 0.0
    %2358 = vmatmul.mubr.f32.gmra.mrb[0].mxu0 %v316
    %v2359 = vpop.f32.mrb[0].mxu0
    %v2360 = vadd.f32 0.0, %v2359
    %v2361 = vpop.f32.mrb[0].mxu0
    %2362 = vmatprep.mubr.f32.mxu0 0.0
    %2363 = vmatmul.mubr.f32.gmra.mrb[0].mxu0 %v319
    %v2364 = vpop.f32.mrb[0].mxu0
    %v2365 = vadd.f32 0.0, %v2364
    %v2366 = vpop.f32.mrb[0].mxu0
    %2367 = vmatprep.mubr.f32.mxu0 0.0
    %2368 = vmatmul.mubr.f32.gmra.mrb[0].mxu0 %v322
    %v2369 = vpop.f32.mrb[0].mxu0
    %v2370 = vadd.f32 0.0, %v2369
    %v2371 = vpop.f32.mrb[0].mxu0
    %2372 = vdwg.mxu0
    %v2373 = vadd.f32 %v2212, %v2295
    %v2374 = vadd.f32 %v2213, %v2300
    %v2375 = vadd.f32 %v2214, %v2305
    %v2376 = vadd.f32 %v2215, %v2310
    %v2377 = vadd.f32 %v2216, %v2315
    %v2378 = vadd.f32 %v2217, %v2320
    %v2379 = vadd.f32 %v2218, %v2325
    %v2380 = vadd.f32 %v2219, %v2330
    %v2381 = vadd.f32 %v2220, %v2335
    %v2382 = vadd.f32 %v2221, %v2340
    %v2383 = vadd.f32 %v2222, %v2345
    %v2384 = vadd.f32 %v2223, %v2350
    %v2385 = vadd.f32 %v2224, %v2355
    %v2386 = vadd.f32 %v2225, %v2360
    %v2387 = vadd.f32 %v2226, %v2365
    %v2388 = vadd.f32 %v2227, %v2370
    %v2389 = vtanh.pop %v2373
    %v2390 = vtanh.pop %v2374
    %v2391 = vtanh.pop %v2375
    %v2392 = vtanh.pop %v2376
    %v2393 = vtanh.pop %v2377
    %v2394 = vtanh.pop %v2378
    %v2395 = vtanh.pop %v2379
    %v2396 = vtanh.pop %v2380
    %v2397 = vtanh.pop %v2381
    %v2398 = vtanh.pop %v2382
    %v2399 = vtanh.pop %v2383
    %v2400 = vtanh.pop %v2384
    %v2401 = vtanh.pop %v2385
    %v2402 = vtanh.pop %v2386
    %v2403 = vtanh.pop %v2387
    %v2404 = vtanh.pop %v2388
    %v2405 = vmul.f32 %v2389, 0.5
    %v2406 = vmul.f32 %v2390, 0.5
    %v2407 = vmul.f32 %v2391, 0.5
    %v2408 = vmul.f32 %v2392, 0.5
    %v2409 = vadd.f32 %v2405, 0.5
    %v2410 = vadd.f32 %v2406, 0.5
    %v2411 = vadd.f32 %v2407, 0.5
    %v2412 = vadd.f32 %v2408, 0.5
    %v2413 = vmul.f32 %v2393, 0.5
    %v2414 = vmul.f32 %v2394, 0.5
    %v2415 = vmul.f32 %v2395, 0.5
    %v2416 = vmul.f32 %v2396, 0.5
    %v2417 = vadd.f32 %v2413, 0.5
    %v2418 = vadd.f32 %v2414, 0.5
    %v2419 = vadd.f32 %v2415, 0.5
    %v2420 = vadd.f32 %v2416, 0.5
    %v2421 = vmul.f32 %v2401, 0.5
    %v2422 = vmul.f32 %v2402, 0.5
    %v2423 = vmul.f32 %v2403, 0.5
    %v2424 = vmul.f32 %v2404, 0.5
    %v2425 = vadd.f32 %v2421, 0.5
    %v2426 = vadd.f32 %v2422, 0.5
    %v2427 = vadd.f32 %v2423, 0.5
    %v2428 = vadd.f32 %v2424, 0.5
    %v2429 = vmul.f32 %v2417, %v2188
    %v2430 = vmul.f32 %v2418, %v2189
    %v2431 = vmul.f32 %v2419, %v2190
    %v2432 = vmul.f32 %v2420, %v2191
    %v2433 = vmul.f32 %v2409, %v2397
    %v2434 = vmul.f32 %v2410, %v2398
    %v2435 = vmul.f32 %v2411, %v2399
    %v2436 = vmul.f32 %v2412, %v2400
    %v2437 = vadd.f32 %v2429, %v2433
    %v2438 = vadd.f32 %v2430, %v2434
    %v2439 = vadd.f32 %v2431, %v2435
    %v2440 = vadd.f32 %v2432, %v2436
    %v2441 = vtanh.pop %v2437
    %v2442 = vtanh.pop %v2438
    %v2443 = vtanh.pop %v2439
    %v2444 = vtanh.pop %v2440
    %v2445 = vmul.f32 %v2425, %v2441
    %v2446 = vmul.f32 %v2426, %v2442
    %v2447 = vmul.f32 %v2427, %v2443
    %v2448 = vmul.f32 %v2428, %v2444
    %vm2449 = vcmp.gt.s32.totalorder %v78, 7
    %v2450 = vsel %vm2449, 1, 0
    %v2451 = vlaneseq
    %v2452 = vshrl.u32 %v2451, 7
    %v2453 = vsub.s32 0, %v2452
    %v2454 = vrot.slane %v2450, %v2453
    %vm2455 = vcmp.eq.s32.totalorder %v2454, 1
    %v2456 = vsel %vm2455, %v2445, %v2184
    %v2457 = vsel %vm2455, %v2446, %v2185
    %v2458 = vsel %vm2455, %v2447, %v2186
    %v2459 = vsel %vm2455, %v2448, %v2187
    %2461 = vset.pattern.permute.xlu0 0
    %2462 = vperm.xlu0 %2461, %v76
    %v2463 = vpop.permute.xlu0 %2462
    %v2466 = vsel %vm275, %v75, 0
    %2468 = vmatprep.subr.mxu0 0.0
    %2469 = vmatpush1.msra.mxu0 %v2456
    %2470 = vmatprep.subr.mxu0 0.0
    %2471 = vmatpush1.msra.mxu0 %v2457
    %2472 = vmatprep.subr.mxu0 0.0
    %2473 = vmatpush1.msra.mxu0 %v2458
    %2474 = vmatprep.subr.mxu0 0.0
    %2475 = vmatpush1.msra.mxu0 %v2459
    %2476 = vmatprep.subr.mxu0 0.0
    %2477 = vmatpush1.msra.mxu0 0.0
    %2478 = vmatprep.subr.mxu0 0.0
    %2479 = vmatpush1.msra.mxu0 0.0
    %2480 = vmatprep.subr.mxu0 0.0
    %2481 = vmatpush1.msra.mxu0 0.0
    %2482 = vmatprep.subr.mxu0 0.0
    %2483 = vmatpush1.msra.mxu0 0.0
    %2484 = vmatprep.subr.mxu0 0.0
    %2485 = vmatpush1.msra.mxu0 0.0
    %2486 = vmatprep.subr.mxu0 0.0
    %2487 = vmatpush1.msra.mxu0 0.0
    %2488 = vmatprep.subr.mxu0 0.0
    %2489 = vmatpush1.msra.mxu0 0.0
    %2490 = vmatprep.subr.mxu0 0.0
    %2491 = vmatpush1.msra.mxu0 0.0
    %2492 = vmatprep.subr.mxu0 0.0
    %2493 = vmatpush1.msra.mxu0 0.0
    %2494 = vmatprep.subr.mxu0 0.0
    %2495 = vmatpush1.msra.mxu0 0.0
    %2496 = vmatprep.subr.mxu0 0.0
    %2497 = vmatpush1.msra.mxu0 0.0
    %2498 = vmatprep.subr.mxu0 0.0
    %2499 = vmatpush1.msra.mxu0 0.0
    %2500 = vmatprep.subr.mxu0 0.0
    %2501 = vmatpush1.msra.mxu0 0.0
    %2502 = vmatprep.subr.mxu0 0.0
    %2503 = vmatpush1.msra.mxu0 0.0
    %2504 = vmatprep.subr.mxu0 0.0
    %2505 = vmatpush1.msra.mxu0 0.0
    %2506 = vmatprep.subr.mxu0 0.0
    %2507 = vmatpush1.msra.mxu0 0.0
    %2508 = vmatprep.subr.mxu0 0.0
    %2509 = vmatpush1.msra.mxu0 0.0
    %2510 = vmatprep.subr.mxu0 0.0
    %2511 = vmatpush1.msra.mxu0 0.0
    %2512 = vmatprep.subr.mxu0 0.0
    %2513 = vmatpush1.msra.mxu0 0.0
    %2514 = vmatprep.subr.mxu0 0.0
    %2515 = vmatpush1.msra.mxu0 0.0
    %2516 = vmatprep.subr.mxu0 0.0
    %2517 = vmatpush1.msra.mxu0 0.0
    %2518 = vmatprep.subr.mxu0 0.0
    %2519 = vmatpush1.msra.mxu0 0.0
    %2520 = vmatprep.subr.mxu0 0.0
    %2521 = vmatpush1.msra.mxu0 0.0
    %2522 = vmatprep.subr.mxu0 0.0
    %2523 = vmatpush1.msra.mxu0 0.0
    %2524 = vmatprep.subr.mxu0 0.0
    %2525 = vmatpush1.msra.mxu0 0.0
    %2526 = vmatprep.subr.mxu0 0.0
    %2527 = vmatpush1.msra.mxu0 0.0
    %2528 = vmatprep.subr.mxu0 0.0
    %2529 = vmatpush1.msra.mxu0 0.0
    %2530 = vmatprep.subr.mxu0 0.0
    %2531 = vmatpush1.msra.mxu0 0.0
    %2532 = vmatprep.mubr.f32.mxu0 0.0
    %2533 = vmatmul.mubr.f32.gmra.mrb[0].mxu0 %v2466
    %v2534 = vpop.f32.mrb[0].mxu0
    %v2535 = vadd.f32 %v2463, %v2534
    %v2536 = vpop.f32.mrb[0].mxu0
    %2537 = vdwg.mxu0
    %2538 = vst [vmem:[#allocation2] sm:$0xff] %v2535
    // Predicated region
    $region30: #{tpu_custom_call.1} parent=1 // pred_check
      _
    $region31: #{tpu_custom_call.1} parent=1 // pred_check_branch
      %2540 = sbr.rel (0) target = $region33
    $region32: #{tpu_custom_call.1} parent=1 // pred_region
      %s2542 = ssub.s32 128, 128
      %2543 = vsyncadd [#allocation3], %s2542
      %s2545 = sshll.u32 [#allocation2], 4
      %s2546 = int_to_ptr.vmem [resolvable:$true] %s2545
      %2548 = dma.vmem_to_hbm [thread:$0]  %s2546, 128, %s7, [#allocation3]
    $region33: #{tpu_custom_call.1} parent=1 // pred_fallthru
      _
    // Predicated region
    $region34: #{tpu_custom_call.1} parent=1 // pred_check
      _
    $region35: #{tpu_custom_call.1} parent=1 // pred_check_branch
      %2550 = sbr.rel (0) target = $region37
    $region36: #{tpu_custom_call.1} parent=1 // pred_region
      %2551 = dma.done [#allocation3], 128
    $region37: #{tpu_custom_call.1} parent=1 // pred_fallthru
      _
    %2552 = vsyncpa [#allocation3], 1

</llo_original>
